<compile_context>
chip_gen: v7x
topology: tpu7x:2x2x1
jax: 0.10.0
libtpu: 0.0.40
codegen_flags: <defaults>
</compile_context>

<pallas_src>
import functools

import jax
import jax.numpy as jnp
from jax.experimental import pallas as pl
from jax.experimental.pallas import tpu as pltpu


def _lstm_kernel(x_ref, wih0_ref, whh0_ref, b0_ref,
                 wih1_ref, whh1_ref, b1_ref, wfc_ref, bfc_ref,
                 out_ref, *, seq_len, batch, hidden_dim):
    """Single invocation: full sequence recurrence for both layers + final fc.

    x_ref is time-major, flattened: (T*B, D) with row index = t*B + b.
    `batch` here is the padded batch (multiple of 8).
    """
    T, B, H = seq_len, batch, hidden_dim

    wih0 = wih0_ref[...]            # (D, 4H)
    whh0 = whh0_ref[...]            # (H, 4H)
    b0 = b0_ref[...]                # (1, 4H)
    wih1 = wih1_ref[...]            # (H, 4H)
    whh1 = whh1_ref[...]            # (H, 4H)

    # Hoisted layer-0 input projection for ALL time steps: one batched matmul
    # (T*B, D) @ (D, 4H) outside the serial dependency chain. The +b0 here is
    # the only broadcast of b0 (done once, outside the loop).
    xg0 = jnp.dot(x_ref[...], wih0, preferred_element_type=jnp.float32) + b0

    # Pre-broadcast layer-1 bias once (avoid T un-CSE'd broadcasts in the loop).
    b1b = jnp.broadcast_to(b1_ref[...], (B, 4 * H))

    def gates_to_hc(gates, c_prev):
        # One full-width sigmoid push + one full-width tanh push (4H = 128
        # lanes = one vreg), then slice. Gate order is PyTorch's [i, f, g, o].
        sig = jax.nn.sigmoid(gates)          # one EUP push
        tah = jnp.tanh(gates)                # one EUP push
        i = sig[:, 0 * H:1 * H]
        f = sig[:, 1 * H:2 * H]
        g = tah[:, 2 * H:3 * H]
        o = sig[:, 3 * H:4 * H]
        c_new = f * c_prev + i * g
        h_new = o * jnp.tanh(c_new)
        return h_new, c_new

    z = jnp.zeros((B, H), jnp.float32)
    h0, c0, h1, c1 = z, z, z, z

    # T is small & static: full unroll keeps h/c in vregs, single basic block
    # gives the LLO scheduler visibility to overlap independent MXU pushes.
    for t in range(T):
        # layer 0: recurrent matmul only (input projection already hoisted).
        g0 = xg0[t * B:(t + 1) * B, :] + jnp.dot(
            h0, whh0, preferred_element_type=jnp.float32)
        h0, c0 = gates_to_hc(g0, c0)

        # layer 1: two independent MXU dots (no lane-axis concat). The
        # h1 @ Whh1 push does not depend on h0_t and can overlap layer-0 work.
        g1 = (jnp.dot(h0, wih1, preferred_element_type=jnp.float32)
              + jnp.dot(h1, whh1, preferred_element_type=jnp.float32)
              + b1b)
        h1, c1 = gates_to_hc(g1, c1)

    # final Linear on the last time step's top-layer hidden state.
    out_ref[...] = (jnp.dot(h1, wfc_ref[...],
                            preferred_element_type=jnp.float32)
                    + bfc_ref[...]).astype(out_ref.dtype)


def lstm_model_forward(x, params):
    """x: (B, T, D) float32.  Returns (B, output_dim) float32."""
    B, T, D = x.shape
    wih0, whh0, b0, wih1, whh1, b1, wfc, bfc = params
    H = whh0.shape[0]
    O = wfc.shape[1]

    # Pad batch to a full f32 sublane group (8 rows): per-step row slices are
    # sublane-aligned and MXU LHS rows are better filled. Padded rows are zero
    # and independent of real rows; output is sliced back below.
    B_pad = max(8, ((B + 7) // 8) * 8)
    if B_pad != B:
        x = jnp.pad(x, ((0, B_pad - B), (0, 0), (0, 0)))

    # Layout plumbing in plain JAX (cheap, outside the kernel): time-major,
    # flattened x so the kernel does ONE (T*B_pad, D)@(D, 4H) input projection.
    x_tb = jnp.transpose(x, (1, 0, 2)).reshape(T * B_pad, D)   # row = t*B_pad + b

    full = lambda shape: pl.BlockSpec(shape, lambda i, s=shape: (0,) * len(s))

    kernel = functools.partial(_lstm_kernel, seq_len=T, batch=B_pad,
                               hidden_dim=H)

    out_pad = pl.pallas_call(
        kernel,
        out_shape=jax.ShapeDtypeStruct((B_pad, O), jnp.float32),
        grid_spec=pltpu.PrefetchScalarGridSpec(
            num_scalar_prefetch=0,
            grid=(1,),                      # single invocation; loop lives in-kernel
            in_specs=[
                full(x_tb.shape),
                full(wih0.shape), full(whh0.shape), full(b0.shape),
                full(wih1.shape), full(whh1.shape), full(b1.shape),
                full(wfc.shape), full(bfc.shape),
            ],
            out_specs=pl.BlockSpec((B_pad, O), lambda i: (0, 0)),
        ),
        compiler_params=pltpu.CompilerParams(
            dimension_semantics=("arbitrary",)),
    )(x_tb, wih0, whh0, b0, wih1, whh1, b1, wfc, bfc)

    return out_pad[:B]


def init_params(key, input_dim, hidden_dim, output_dim):
    """Deterministic init mimicking PyTorch's uniform(-1/sqrt(H), 1/sqrt(H))."""
    H = hidden_dim
    bound = 1.0 / jnp.sqrt(jnp.float32(H))
    ks = jax.random.split(key, 10)
    u = lambda k, shape: jax.random.uniform(k, shape, jnp.float32, -bound, bound)

    # PyTorch stores weight_ih_l* as (4H, in); we pre-transpose to (in, 4H).
    wih0 = u(ks[0], (input_dim, 4 * H))
    whh0 = u(ks[1], (H, 4 * H))
    b0 = u(ks[2], (1, 4 * H)) + u(ks[3], (1, 4 * H))   # b_ih + b_hh combined
    wih1 = u(ks[4], (H, 4 * H))
    whh1 = u(ks[5], (H, 4 * H))
    b1 = u(ks[6], (1, 4 * H)) + u(ks[7], (1, 4 * H))
    wfc = u(ks[8], (H, output_dim))                    # fc.weight.T
    bfc = u(ks[9], (1, output_dim))
    return (wih0, whh0, b0, wih1, whh1, b1, wfc, bfc)


def reference_forward(x, params):
    """Pure-JAX reference (same math as PyTorch forward) for validation."""
    wih0, whh0, b0, wih1, whh1, b1, wfc, bfc = params
    B, T, D = x.shape
    H = whh0.shape[0]

    def cell(inp, h_prev, c_prev, wih, whh, b):
        gates = inp @ wih + h_prev @ whh + b
        i = jax.nn.sigmoid(gates[:, 0 * H:1 * H])
        f = jax.nn.sigmoid(gates[:, 1 * H:2 * H])
        g = jnp.tanh(gates[:, 2 * H:3 * H])
        o = jax.nn.sigmoid(gates[:, 3 * H:4 * H])
        c = f * c_prev + i * g
        h = o * jnp.tanh(c)
        return h, c

    def step(carry, x_t):
        h0, c0, h1, c1 = carry
        h0, c0 = cell(x_t, h0, c0, wih0, whh0, b0)
        h1, c1 = cell(h0, h1, c1, wih1, whh1, b1)
        return (h0, c0, h1, c1), None

    z = jnp.zeros((B, H), jnp.float32)
    (h0, c0, h1, c1), _ = jax.lax.scan(step, (z, z, z, z),
                                       jnp.transpose(x, (1, 0, 2)))
    return h1 @ wfc + bfc


if __name__ == "__main__":
    B, T, D = 2, 8, 4        # batch, seq_len, input_dim
    H, L, O = 32, 2, 1       # hidden_dim, layer_dim (fixed at 2 in kernel), output_dim

    key = jax.random.PRNGKey(0)
    kx, kp = jax.random.split(key)
    x = jax.random.normal(kx, (B, T, D), jnp.float32)
    params = init_params(kp, D, H, O)

    out = lstm_model_forward(x, params)
    out = jax.block_until_ready(out)

    ref = reference_forward(x, params)
    assert out.shape == (B, O), out.shape
    assert jnp.allclose(out, ref, atol=2e-5, rtol=2e-5), (out, ref)

    print("KERNEL_OK")
</pallas_src>

<mosaic_0001>
module attributes {stable_mosaic.version = 11 : i64} {
  func.func @_lstm_kernel(%arg0: i32, %arg1: memref<64x4xf32, #tpu.memory_space<vmem>>, %arg2: memref<4x128xf32, #tpu.memory_space<vmem>>, %arg3: memref<32x128xf32, #tpu.memory_space<vmem>>, %arg4: memref<1x128xf32, #tpu.memory_space<vmem>>, %arg5: memref<32x128xf32, #tpu.memory_space<vmem>>, %arg6: memref<32x128xf32, #tpu.memory_space<vmem>>, %arg7: memref<1x128xf32, #tpu.memory_space<vmem>>, %arg8: memref<32x1xf32, #tpu.memory_space<vmem>>, %arg9: memref<1x1xf32, #tpu.memory_space<vmem>>, %arg10: memref<8x1xf32, #tpu.memory_space<vmem>>) attributes {dimension_semantics = [#tpu.dimension_semantics<arbitrary>], iteration_bounds = array<i64: 1>, scalar_prefetch = 0 : i64, scratch_operands = 0 : i64, tpu.core_type = #tpu.core_type<tc>, window_params = [{pipeline_mode = #tpu.pipeline_mode<synchronous>, transform_indices = @transform_0, window_bounds = array<i64: 64, 4>}, {pipeline_mode = #tpu.pipeline_mode<synchronous>, transform_indices = @transform_1, window_bounds = array<i64: 4, 128>}, {pipeline_mode = #tpu.pipeline_mode<synchronous>, transform_indices = @transform_2, window_bounds = array<i64: 32, 128>}, {pipeline_mode = #tpu.pipeline_mode<synchronous>, transform_indices = @transform_3, window_bounds = array<i64: 1, 128>}, {pipeline_mode = #tpu.pipeline_mode<synchronous>, transform_indices = @transform_4, window_bounds = array<i64: 32, 128>}, {pipeline_mode = #tpu.pipeline_mode<synchronous>, transform_indices = @transform_5, window_bounds = array<i64: 32, 128>}, {pipeline_mode = #tpu.pipeline_mode<synchronous>, transform_indices = @transform_6, window_bounds = array<i64: 1, 128>}, {pipeline_mode = #tpu.pipeline_mode<synchronous>, transform_indices = @transform_7, window_bounds = array<i64: 32, 1>}, {pipeline_mode = #tpu.pipeline_mode<synchronous>, transform_indices = @transform_8, window_bounds = array<i64: 1, 1>}, {pipeline_mode = #tpu.pipeline_mode<synchronous>, transform_indices = @transform_9, window_bounds = array<i64: 8, 1>}]} {
    %c0 = arith.constant 0 : index
    %c0_0 = arith.constant 0 : index
    %0 = vector.load %arg2[%c0, %c0_0] : memref<4x128xf32, #tpu.memory_space<vmem>>, vector<4x128xf32>
    %c0_1 = arith.constant 0 : index
    %c0_2 = arith.constant 0 : index
    %1 = vector.load %arg3[%c0_1, %c0_2] : memref<32x128xf32, #tpu.memory_space<vmem>>, vector<32x128xf32>
    %c0_3 = arith.constant 0 : index
    %c0_4 = arith.constant 0 : index
    %2 = vector.load %arg4[%c0_3, %c0_4] : memref<1x128xf32, #tpu.memory_space<vmem>>, vector<1x128xf32>
    %c0_5 = arith.constant 0 : index
    %c0_6 = arith.constant 0 : index
    %3 = vector.load %arg5[%c0_5, %c0_6] : memref<32x128xf32, #tpu.memory_space<vmem>>, vector<32x128xf32>
    %c0_7 = arith.constant 0 : index
    %c0_8 = arith.constant 0 : index
    %4 = vector.load %arg6[%c0_7, %c0_8] : memref<32x128xf32, #tpu.memory_space<vmem>>, vector<32x128xf32>
    %c0_9 = arith.constant 0 : index
    %c0_10 = arith.constant 0 : index
    %5 = vector.load %arg1[%c0_9, %c0_10] : memref<64x4xf32, #tpu.memory_space<vmem>>, vector<64x4xf32>
    %cst = arith.constant dense<0.000000e+00> : vector<64x128xf32>
    %6 = tpu.matmul %5, %0, %cst {dimension_numbers = #tpu.dot_dimension_numbers<[1], [0], [0], [1], [0, 0, 1, 1], [], []>} : vector<64x4xf32>, vector<4x128xf32>, vector<64x128xf32> -> vector<64x128xf32>
    %7 = vector.broadcast %2 : vector<1x128xf32> to vector<64x128xf32>
    %8 = arith.addf %6, %7 : vector<64x128xf32>
    %c0_11 = arith.constant 0 : index
    %c0_12 = arith.constant 0 : index
    %9 = vector.load %arg7[%c0_11, %c0_12] : memref<1x128xf32, #tpu.memory_space<vmem>>, vector<1x128xf32>
    %10 = vector.shape_cast %9 : vector<1x128xf32> to vector<1x128xf32>
    %11 = vector.broadcast %10 : vector<1x128xf32> to vector<8x128xf32>
    %cst_13 = arith.constant 0.000000e+00 : f32
    %12 = vector.broadcast %cst_13 : f32 to vector<8x32xf32>
    %13 = vector.extract_strided_slice %8 {offsets = [0, 0], sizes = [8, 128], strides = [1, 1]} : vector<64x128xf32> to vector<8x128xf32>
    %cst_14 = arith.constant dense<0.000000e+00> : vector<8x128xf32>
    %14 = tpu.matmul %12, %1, %cst_14 {dimension_numbers = #tpu.dot_dimension_numbers<[1], [0], [0], [1], [0, 0, 1, 1], [], []>} : vector<8x32xf32>, vector<32x128xf32>, vector<8x128xf32> -> vector<8x128xf32>
    %15 = arith.addf %13, %14 : vector<8x128xf32>
    %16 = arith.negf %15 : vector<8x128xf32>
    %17 = math.exp %16 : vector<8x128xf32>
    %cst_15 = arith.constant 1.000000e+00 : f32
    %18 = vector.broadcast %cst_15 : f32 to vector<8x128xf32>
    %19 = arith.addf %18, %17 : vector<8x128xf32>
    %20 = arith.divf %18, %19 : vector<8x128xf32>
    %21 = math.tanh %15 : vector<8x128xf32>
    %22 = vector.extract_strided_slice %20 {offsets = [0, 0], sizes = [8, 32], strides = [1, 1]} : vector<8x128xf32> to vector<8x32xf32>
    %23 = vector.extract_strided_slice %20 {offsets = [0, 32], sizes = [8, 32], strides = [1, 1]} : vector<8x128xf32> to vector<8x32xf32>
    %24 = vector.extract_strided_slice %21 {offsets = [0, 64], sizes = [8, 32], strides = [1, 1]} : vector<8x128xf32> to vector<8x32xf32>
    %25 = vector.extract_strided_slice %20 {offsets = [0, 96], sizes = [8, 32], strides = [1, 1]} : vector<8x128xf32> to vector<8x32xf32>
    %26 = arith.mulf %23, %12 : vector<8x32xf32>
    %27 = arith.mulf %22, %24 : vector<8x32xf32>
    %28 = arith.addf %26, %27 : vector<8x32xf32>
    %29 = math.tanh %28 : vector<8x32xf32>
    %30 = arith.mulf %25, %29 : vector<8x32xf32>
    %cst_16 = arith.constant dense<0.000000e+00> : vector<8x128xf32>
    %31 = tpu.matmul %30, %3, %cst_16 {dimension_numbers = #tpu.dot_dimension_numbers<[1], [0], [0], [1], [0, 0, 1, 1], [], []>} : vector<8x32xf32>, vector<32x128xf32>, vector<8x128xf32> -> vector<8x128xf32>
    %cst_17 = arith.constant dense<0.000000e+00> : vector<8x128xf32>
    %32 = tpu.matmul %12, %4, %cst_17 {dimension_numbers = #tpu.dot_dimension_numbers<[1], [0], [0], [1], [0, 0, 1, 1], [], []>} : vector<8x32xf32>, vector<32x128xf32>, vector<8x128xf32> -> vector<8x128xf32>
    %33 = arith.addf %31, %32 : vector<8x128xf32>
    %34 = arith.addf %33, %11 : vector<8x128xf32>
    %35 = arith.negf %34 : vector<8x128xf32>
    %36 = math.exp %35 : vector<8x128xf32>
    %cst_18 = arith.constant 1.000000e+00 : f32
    %37 = vector.broadcast %cst_18 : f32 to vector<8x128xf32>
    %38 = arith.addf %37, %36 : vector<8x128xf32>
    %39 = arith.divf %37, %38 : vector<8x128xf32>
    %40 = math.tanh %34 : vector<8x128xf32>
    %41 = vector.extract_strided_slice %39 {offsets = [0, 0], sizes = [8, 32], strides = [1, 1]} : vector<8x128xf32> to vector<8x32xf32>
    %42 = vector.extract_strided_slice %39 {offsets = [0, 32], sizes = [8, 32], strides = [1, 1]} : vector<8x128xf32> to vector<8x32xf32>
    %43 = vector.extract_strided_slice %40 {offsets = [0, 64], sizes = [8, 32], strides = [1, 1]} : vector<8x128xf32> to vector<8x32xf32>
    %44 = vector.extract_strided_slice %39 {offsets = [0, 96], sizes = [8, 32], strides = [1, 1]} : vector<8x128xf32> to vector<8x32xf32>
    %45 = arith.mulf %42, %12 : vector<8x32xf32>
    %46 = arith.mulf %41, %43 : vector<8x32xf32>
    %47 = arith.addf %45, %46 : vector<8x32xf32>
    %48 = math.tanh %47 : vector<8x32xf32>
    %49 = arith.mulf %44, %48 : vector<8x32xf32>
    %50 = vector.extract_strided_slice %8 {offsets = [8, 0], sizes = [8, 128], strides = [1, 1]} : vector<64x128xf32> to vector<8x128xf32>
    %cst_19 = arith.constant dense<0.000000e+00> : vector<8x128xf32>
    %51 = tpu.matmul %30, %1, %cst_19 {dimension_numbers = #tpu.dot_dimension_numbers<[1], [0], [0], [1], [0, 0, 1, 1], [], []>} : vector<8x32xf32>, vector<32x128xf32>, vector<8x128xf32> -> vector<8x128xf32>
    %52 = arith.addf %50, %51 : vector<8x128xf32>
    %53 = arith.negf %52 : vector<8x128xf32>
    %54 = math.exp %53 : vector<8x128xf32>
    %cst_20 = arith.constant 1.000000e+00 : f32
    %55 = vector.broadcast %cst_20 : f32 to vector<8x128xf32>
    %56 = arith.addf %55, %54 : vector<8x128xf32>
    %57 = arith.divf %55, %56 : vector<8x128xf32>
    %58 = math.tanh %52 : vector<8x128xf32>
    %59 = vector.extract_strided_slice %57 {offsets = [0, 0], sizes = [8, 32], strides = [1, 1]} : vector<8x128xf32> to vector<8x32xf32>
    %60 = vector.extract_strided_slice %57 {offsets = [0, 32], sizes = [8, 32], strides = [1, 1]} : vector<8x128xf32> to vector<8x32xf32>
    %61 = vector.extract_strided_slice %58 {offsets = [0, 64], sizes = [8, 32], strides = [1, 1]} : vector<8x128xf32> to vector<8x32xf32>
    %62 = vector.extract_strided_slice %57 {offsets = [0, 96], sizes = [8, 32], strides = [1, 1]} : vector<8x128xf32> to vector<8x32xf32>
    %63 = arith.mulf %60, %28 : vector<8x32xf32>
    %64 = arith.mulf %59, %61 : vector<8x32xf32>
    %65 = arith.addf %63, %64 : vector<8x32xf32>
    %66 = math.tanh %65 : vector<8x32xf32>
    %67 = arith.mulf %62, %66 : vector<8x32xf32>
    %cst_21 = arith.constant dense<0.000000e+00> : vector<8x128xf32>
    %68 = tpu.matmul %67, %3, %cst_21 {dimension_numbers = #tpu.dot_dimension_numbers<[1], [0], [0], [1], [0, 0, 1, 1], [], []>} : vector<8x32xf32>, vector<32x128xf32>, vector<8x128xf32> -> vector<8x128xf32>
    %cst_22 = arith.constant dense<0.000000e+00> : vector<8x128xf32>
    %69 = tpu.matmul %49, %4, %cst_22 {dimension_numbers = #tpu.dot_dimension_numbers<[1], [0], [0], [1], [0, 0, 1, 1], [], []>} : vector<8x32xf32>, vector<32x128xf32>, vector<8x128xf32> -> vector<8x128xf32>
    %70 = arith.addf %68, %69 : vector<8x128xf32>
    %71 = arith.addf %70, %11 : vector<8x128xf32>
    %72 = arith.negf %71 : vector<8x128xf32>
    %73 = math.exp %72 : vector<8x128xf32>
    %cst_23 = arith.constant 1.000000e+00 : f32
    %74 = vector.broadcast %cst_23 : f32 to vector<8x128xf32>
    %75 = arith.addf %74, %73 : vector<8x128xf32>
    %76 = arith.divf %74, %75 : vector<8x128xf32>
    %77 = math.tanh %71 : vector<8x128xf32>
    %78 = vector.extract_strided_slice %76 {offsets = [0, 0], sizes = [8, 32], strides = [1, 1]} : vector<8x128xf32> to vector<8x32xf32>
    %79 = vector.extract_strided_slice %76 {offsets = [0, 32], sizes = [8, 32], strides = [1, 1]} : vector<8x128xf32> to vector<8x32xf32>
    %80 = vector.extract_strided_slice %77 {offsets = [0, 64], sizes = [8, 32], strides = [1, 1]} : vector<8x128xf32> to vector<8x32xf32>
    %81 = vector.extract_strided_slice %76 {offsets = [0, 96], sizes = [8, 32], strides = [1, 1]} : vector<8x128xf32> to vector<8x32xf32>
    %82 = arith.mulf %79, %47 : vector<8x32xf32>
    %83 = arith.mulf %78, %80 : vector<8x32xf32>
    %84 = arith.addf %82, %83 : vector<8x32xf32>
    %85 = math.tanh %84 : vector<8x32xf32>
    %86 = arith.mulf %81, %85 : vector<8x32xf32>
    %87 = vector.extract_strided_slice %8 {offsets = [16, 0], sizes = [8, 128], strides = [1, 1]} : vector<64x128xf32> to vector<8x128xf32>
    %cst_24 = arith.constant dense<0.000000e+00> : vector<8x128xf32>
    %88 = tpu.matmul %67, %1, %cst_24 {dimension_numbers = #tpu.dot_dimension_numbers<[1], [0], [0], [1], [0, 0, 1, 1], [], []>} : vector<8x32xf32>, vector<32x128xf32>, vector<8x128xf32> -> vector<8x128xf32>
    %89 = arith.addf %87, %88 : vector<8x128xf32>
    %90 = arith.negf %89 : vector<8x128xf32>
    %91 = math.exp %90 : vector<8x128xf32>
    %cst_25 = arith.constant 1.000000e+00 : f32
    %92 = vector.broadcast %cst_25 : f32 to vector<8x128xf32>
    %93 = arith.addf %92, %91 : vector<8x128xf32>
    %94 = arith.divf %92, %93 : vector<8x128xf32>
    %95 = math.tanh %89 : vector<8x128xf32>
    %96 = vector.extract_strided_slice %94 {offsets = [0, 0], sizes = [8, 32], strides = [1, 1]} : vector<8x128xf32> to vector<8x32xf32>
    %97 = vector.extract_strided_slice %94 {offsets = [0, 32], sizes = [8, 32], strides = [1, 1]} : vector<8x128xf32> to vector<8x32xf32>
    %98 = vector.extract_strided_slice %95 {offsets = [0, 64], sizes = [8, 32], strides = [1, 1]} : vector<8x128xf32> to vector<8x32xf32>
    %99 = vector.extract_strided_slice %94 {offsets = [0, 96], sizes = [8, 32], strides = [1, 1]} : vector<8x128xf32> to vector<8x32xf32>
    %100 = arith.mulf %97, %65 : vector<8x32xf32>
    %101 = arith.mulf %96, %98 : vector<8x32xf32>
    %102 = arith.addf %100, %101 : vector<8x32xf32>
    %103 = math.tanh %102 : vector<8x32xf32>
    %104 = arith.mulf %99, %103 : vector<8x32xf32>
    %cst_26 = arith.constant dense<0.000000e+00> : vector<8x128xf32>
    %105 = tpu.matmul %104, %3, %cst_26 {dimension_numbers = #tpu.dot_dimension_numbers<[1], [0], [0], [1], [0, 0, 1, 1], [], []>} : vector<8x32xf32>, vector<32x128xf32>, vector<8x128xf32> -> vector<8x128xf32>
    %cst_27 = arith.constant dense<0.000000e+00> : vector<8x128xf32>
    %106 = tpu.matmul %86, %4, %cst_27 {dimension_numbers = #tpu.dot_dimension_numbers<[1], [0], [0], [1], [0, 0, 1, 1], [], []>} : vector<8x32xf32>, vector<32x128xf32>, vector<8x128xf32> -> vector<8x128xf32>
    %107 = arith.addf %105, %106 : vector<8x128xf32>
    %108 = arith.addf %107, %11 : vector<8x128xf32>
    %109 = arith.negf %108 : vector<8x128xf32>
    %110 = math.exp %109 : vector<8x128xf32>
    %cst_28 = arith.constant 1.000000e+00 : f32
    %111 = vector.broadcast %cst_28 : f32 to vector<8x128xf32>
    %112 = arith.addf %111, %110 : vector<8x128xf32>
    %113 = arith.divf %111, %112 : vector<8x128xf32>
    %114 = math.tanh %108 : vector<8x128xf32>
    %115 = vector.extract_strided_slice %113 {offsets = [0, 0], sizes = [8, 32], strides = [1, 1]} : vector<8x128xf32> to vector<8x32xf32>
    %116 = vector.extract_strided_slice %113 {offsets = [0, 32], sizes = [8, 32], strides = [1, 1]} : vector<8x128xf32> to vector<8x32xf32>
    %117 = vector.extract_strided_slice %114 {offsets = [0, 64], sizes = [8, 32], strides = [1, 1]} : vector<8x128xf32> to vector<8x32xf32>
    %118 = vector.extract_strided_slice %113 {offsets = [0, 96], sizes = [8, 32], strides = [1, 1]} : vector<8x128xf32> to vector<8x32xf32>
    %119 = arith.mulf %116, %84 : vector<8x32xf32>
    %120 = arith.mulf %115, %117 : vector<8x32xf32>
    %121 = arith.addf %119, %120 : vector<8x32xf32>
    %122 = math.tanh %121 : vector<8x32xf32>
    %123 = arith.mulf %118, %122 : vector<8x32xf32>
    %124 = vector.extract_strided_slice %8 {offsets = [24, 0], sizes = [8, 128], strides = [1, 1]} : vector<64x128xf32> to vector<8x128xf32>
    %cst_29 = arith.constant dense<0.000000e+00> : vector<8x128xf32>
    %125 = tpu.matmul %104, %1, %cst_29 {dimension_numbers = #tpu.dot_dimension_numbers<[1], [0], [0], [1], [0, 0, 1, 1], [], []>} : vector<8x32xf32>, vector<32x128xf32>, vector<8x128xf32> -> vector<8x128xf32>
    %126 = arith.addf %124, %125 : vector<8x128xf32>
    %127 = arith.negf %126 : vector<8x128xf32>
    %128 = math.exp %127 : vector<8x128xf32>
    %cst_30 = arith.constant 1.000000e+00 : f32
    %129 = vector.broadcast %cst_30 : f32 to vector<8x128xf32>
    %130 = arith.addf %129, %128 : vector<8x128xf32>
    %131 = arith.divf %129, %130 : vector<8x128xf32>
    %132 = math.tanh %126 : vector<8x128xf32>
    %133 = vector.extract_strided_slice %131 {offsets = [0, 0], sizes = [8, 32], strides = [1, 1]} : vector<8x128xf32> to vector<8x32xf32>
    %134 = vector.extract_strided_slice %131 {offsets = [0, 32], sizes = [8, 32], strides = [1, 1]} : vector<8x128xf32> to vector<8x32xf32>
    %135 = vector.extract_strided_slice %132 {offsets = [0, 64], sizes = [8, 32], strides = [1, 1]} : vector<8x128xf32> to vector<8x32xf32>
    %136 = vector.extract_strided_slice %131 {offsets = [0, 96], sizes = [8, 32], strides = [1, 1]} : vector<8x128xf32> to vector<8x32xf32>
    %137 = arith.mulf %134, %102 : vector<8x32xf32>
    %138 = arith.mulf %133, %135 : vector<8x32xf32>
    %139 = arith.addf %137, %138 : vector<8x32xf32>
    %140 = math.tanh %139 : vector<8x32xf32>
    %141 = arith.mulf %136, %140 : vector<8x32xf32>
    %cst_31 = arith.constant dense<0.000000e+00> : vector<8x128xf32>
    %142 = tpu.matmul %141, %3, %cst_31 {dimension_numbers = #tpu.dot_dimension_numbers<[1], [0], [0], [1], [0, 0, 1, 1], [], []>} : vector<8x32xf32>, vector<32x128xf32>, vector<8x128xf32> -> vector<8x128xf32>
    %cst_32 = arith.constant dense<0.000000e+00> : vector<8x128xf32>
    %143 = tpu.matmul %123, %4, %cst_32 {dimension_numbers = #tpu.dot_dimension_numbers<[1], [0], [0], [1], [0, 0, 1, 1], [], []>} : vector<8x32xf32>, vector<32x128xf32>, vector<8x128xf32> -> vector<8x128xf32>
    %144 = arith.addf %142, %143 : vector<8x128xf32>
    %145 = arith.addf %144, %11 : vector<8x128xf32>
    %146 = arith.negf %145 : vector<8x128xf32>
    %147 = math.exp %146 : vector<8x128xf32>
    %cst_33 = arith.constant 1.000000e+00 : f32
    %148 = vector.broadcast %cst_33 : f32 to vector<8x128xf32>
    %149 = arith.addf %148, %147 : vector<8x128xf32>
    %150 = arith.divf %148, %149 : vector<8x128xf32>
    %151 = math.tanh %145 : vector<8x128xf32>
    %152 = vector.extract_strided_slice %150 {offsets = [0, 0], sizes = [8, 32], strides = [1, 1]} : vector<8x128xf32> to vector<8x32xf32>
    %153 = vector.extract_strided_slice %150 {offsets = [0, 32], sizes = [8, 32], strides = [1, 1]} : vector<8x128xf32> to vector<8x32xf32>
    %154 = vector.extract_strided_slice %151 {offsets = [0, 64], sizes = [8, 32], strides = [1, 1]} : vector<8x128xf32> to vector<8x32xf32>
    %155 = vector.extract_strided_slice %150 {offsets = [0, 96], sizes = [8, 32], strides = [1, 1]} : vector<8x128xf32> to vector<8x32xf32>
    %156 = arith.mulf %153, %121 : vector<8x32xf32>
    %157 = arith.mulf %152, %154 : vector<8x32xf32>
    %158 = arith.addf %156, %157 : vector<8x32xf32>
    %159 = math.tanh %158 : vector<8x32xf32>
    %160 = arith.mulf %155, %159 : vector<8x32xf32>
    %161 = vector.extract_strided_slice %8 {offsets = [32, 0], sizes = [8, 128], strides = [1, 1]} : vector<64x128xf32> to vector<8x128xf32>
    %cst_34 = arith.constant dense<0.000000e+00> : vector<8x128xf32>
    %162 = tpu.matmul %141, %1, %cst_34 {dimension_numbers = #tpu.dot_dimension_numbers<[1], [0], [0], [1], [0, 0, 1, 1], [], []>} : vector<8x32xf32>, vector<32x128xf32>, vector<8x128xf32> -> vector<8x128xf32>
    %163 = arith.addf %161, %162 : vector<8x128xf32>
    %164 = arith.negf %163 : vector<8x128xf32>
    %165 = math.exp %164 : vector<8x128xf32>
    %cst_35 = arith.constant 1.000000e+00 : f32
    %166 = vector.broadcast %cst_35 : f32 to vector<8x128xf32>
    %167 = arith.addf %166, %165 : vector<8x128xf32>
    %168 = arith.divf %166, %167 : vector<8x128xf32>
    %169 = math.tanh %163 : vector<8x128xf32>
    %170 = vector.extract_strided_slice %168 {offsets = [0, 0], sizes = [8, 32], strides = [1, 1]} : vector<8x128xf32> to vector<8x32xf32>
    %171 = vector.extract_strided_slice %168 {offsets = [0, 32], sizes = [8, 32], strides = [1, 1]} : vector<8x128xf32> to vector<8x32xf32>
    %172 = vector.extract_strided_slice %169 {offsets = [0, 64], sizes = [8, 32], strides = [1, 1]} : vector<8x128xf32> to vector<8x32xf32>
    %173 = vector.extract_strided_slice %168 {offsets = [0, 96], sizes = [8, 32], strides = [1, 1]} : vector<8x128xf32> to vector<8x32xf32>
    %174 = arith.mulf %171, %139 : vector<8x32xf32>
    %175 = arith.mulf %170, %172 : vector<8x32xf32>
    %176 = arith.addf %174, %175 : vector<8x32xf32>
    %177 = math.tanh %176 : vector<8x32xf32>
    %178 = arith.mulf %173, %177 : vector<8x32xf32>
    %cst_36 = arith.constant dense<0.000000e+00> : vector<8x128xf32>
    %179 = tpu.matmul %178, %3, %cst_36 {dimension_numbers = #tpu.dot_dimension_numbers<[1], [0], [0], [1], [0, 0, 1, 1], [], []>} : vector<8x32xf32>, vector<32x128xf32>, vector<8x128xf32> -> vector<8x128xf32>
    %cst_37 = arith.constant dense<0.000000e+00> : vector<8x128xf32>
    %180 = tpu.matmul %160, %4, %cst_37 {dimension_numbers = #tpu.dot_dimension_numbers<[1], [0], [0], [1], [0, 0, 1, 1], [], []>} : vector<8x32xf32>, vector<32x128xf32>, vector<8x128xf32> -> vector<8x128xf32>
    %181 = arith.addf %179, %180 : vector<8x128xf32>
    %182 = arith.addf %181, %11 : vector<8x128xf32>
    %183 = arith.negf %182 : vector<8x128xf32>
    %184 = math.exp %183 : vector<8x128xf32>
    %cst_38 = arith.constant 1.000000e+00 : f32
    %185 = vector.broadcast %cst_38 : f32 to vector<8x128xf32>
    %186 = arith.addf %185, %184 : vector<8x128xf32>
    %187 = arith.divf %185, %186 : vector<8x128xf32>
    %188 = math.tanh %182 : vector<8x128xf32>
    %189 = vector.extract_strided_slice %187 {offsets = [0, 0], sizes = [8, 32], strides = [1, 1]} : vector<8x128xf32> to vector<8x32xf32>
    %190 = vector.extract_strided_slice %187 {offsets = [0, 32], sizes = [8, 32], strides = [1, 1]} : vector<8x128xf32> to vector<8x32xf32>
    %191 = vector.extract_strided_slice %188 {offsets = [0, 64], sizes = [8, 32], strides = [1, 1]} : vector<8x128xf32> to vector<8x32xf32>
    %192 = vector.extract_strided_slice %187 {offsets = [0, 96], sizes = [8, 32], strides = [1, 1]} : vector<8x128xf32> to vector<8x32xf32>
    %193 = arith.mulf %190, %158 : vector<8x32xf32>
    %194 = arith.mulf %189, %191 : vector<8x32xf32>
    %195 = arith.addf %193, %194 : vector<8x32xf32>
    %196 = math.tanh %195 : vector<8x32xf32>
    %197 = arith.mulf %192, %196 : vector<8x32xf32>
    %198 = vector.extract_strided_slice %8 {offsets = [40, 0], sizes = [8, 128], strides = [1, 1]} : vector<64x128xf32> to vector<8x128xf32>
    %cst_39 = arith.constant dense<0.000000e+00> : vector<8x128xf32>
    %199 = tpu.matmul %178, %1, %cst_39 {dimension_numbers = #tpu.dot_dimension_numbers<[1], [0], [0], [1], [0, 0, 1, 1], [], []>} : vector<8x32xf32>, vector<32x128xf32>, vector<8x128xf32> -> vector<8x128xf32>
    %200 = arith.addf %198, %199 : vector<8x128xf32>
    %201 = arith.negf %200 : vector<8x128xf32>
    %202 = math.exp %201 : vector<8x128xf32>
    %cst_40 = arith.constant 1.000000e+00 : f32
    %203 = vector.broadcast %cst_40 : f32 to vector<8x128xf32>
    %204 = arith.addf %203, %202 : vector<8x128xf32>
    %205 = arith.divf %203, %204 : vector<8x128xf32>
    %206 = math.tanh %200 : vector<8x128xf32>
    %207 = vector.extract_strided_slice %205 {offsets = [0, 0], sizes = [8, 32], strides = [1, 1]} : vector<8x128xf32> to vector<8x32xf32>
    %208 = vector.extract_strided_slice %205 {offsets = [0, 32], sizes = [8, 32], strides = [1, 1]} : vector<8x128xf32> to vector<8x32xf32>
    %209 = vector.extract_strided_slice %206 {offsets = [0, 64], sizes = [8, 32], strides = [1, 1]} : vector<8x128xf32> to vector<8x32xf32>
    %210 = vector.extract_strided_slice %205 {offsets = [0, 96], sizes = [8, 32], strides = [1, 1]} : vector<8x128xf32> to vector<8x32xf32>
    %211 = arith.mulf %208, %176 : vector<8x32xf32>
    %212 = arith.mulf %207, %209 : vector<8x32xf32>
    %213 = arith.addf %211, %212 : vector<8x32xf32>
    %214 = math.tanh %213 : vector<8x32xf32>
    %215 = arith.mulf %210, %214 : vector<8x32xf32>
    %cst_41 = arith.constant dense<0.000000e+00> : vector<8x128xf32>
    %216 = tpu.matmul %215, %3, %cst_41 {dimension_numbers = #tpu.dot_dimension_numbers<[1], [0], [0], [1], [0, 0, 1, 1], [], []>} : vector<8x32xf32>, vector<32x128xf32>, vector<8x128xf32> -> vector<8x128xf32>
    %cst_42 = arith.constant dense<0.000000e+00> : vector<8x128xf32>
    %217 = tpu.matmul %197, %4, %cst_42 {dimension_numbers = #tpu.dot_dimension_numbers<[1], [0], [0], [1], [0, 0, 1, 1], [], []>} : vector<8x32xf32>, vector<32x128xf32>, vector<8x128xf32> -> vector<8x128xf32>
    %218 = arith.addf %216, %217 : vector<8x128xf32>
    %219 = arith.addf %218, %11 : vector<8x128xf32>
    %220 = arith.negf %219 : vector<8x128xf32>
    %221 = math.exp %220 : vector<8x128xf32>
    %cst_43 = arith.constant 1.000000e+00 : f32
    %222 = vector.broadcast %cst_43 : f32 to vector<8x128xf32>
    %223 = arith.addf %222, %221 : vector<8x128xf32>
    %224 = arith.divf %222, %223 : vector<8x128xf32>
    %225 = math.tanh %219 : vector<8x128xf32>
    %226 = vector.extract_strided_slice %224 {offsets = [0, 0], sizes = [8, 32], strides = [1, 1]} : vector<8x128xf32> to vector<8x32xf32>
    %227 = vector.extract_strided_slice %224 {offsets = [0, 32], sizes = [8, 32], strides = [1, 1]} : vector<8x128xf32> to vector<8x32xf32>
    %228 = vector.extract_strided_slice %225 {offsets = [0, 64], sizes = [8, 32], strides = [1, 1]} : vector<8x128xf32> to vector<8x32xf32>
    %229 = vector.extract_strided_slice %224 {offsets = [0, 96], sizes = [8, 32], strides = [1, 1]} : vector<8x128xf32> to vector<8x32xf32>
    %230 = arith.mulf %227, %195 : vector<8x32xf32>
    %231 = arith.mulf %226, %228 : vector<8x32xf32>
    %232 = arith.addf %230, %231 : vector<8x32xf32>
    %233 = math.tanh %232 : vector<8x32xf32>
    %234 = arith.mulf %229, %233 : vector<8x32xf32>
    %235 = vector.extract_strided_slice %8 {offsets = [48, 0], sizes = [8, 128], strides = [1, 1]} : vector<64x128xf32> to vector<8x128xf32>
    %cst_44 = arith.constant dense<0.000000e+00> : vector<8x128xf32>
    %236 = tpu.matmul %215, %1, %cst_44 {dimension_numbers = #tpu.dot_dimension_numbers<[1], [0], [0], [1], [0, 0, 1, 1], [], []>} : vector<8x32xf32>, vector<32x128xf32>, vector<8x128xf32> -> vector<8x128xf32>
    %237 = arith.addf %235, %236 : vector<8x128xf32>
    %238 = arith.negf %237 : vector<8x128xf32>
    %239 = math.exp %238 : vector<8x128xf32>
    %cst_45 = arith.constant 1.000000e+00 : f32
    %240 = vector.broadcast %cst_45 : f32 to vector<8x128xf32>
    %241 = arith.addf %240, %239 : vector<8x128xf32>
    %242 = arith.divf %240, %241 : vector<8x128xf32>
    %243 = math.tanh %237 : vector<8x128xf32>
    %244 = vector.extract_strided_slice %242 {offsets = [0, 0], sizes = [8, 32], strides = [1, 1]} : vector<8x128xf32> to vector<8x32xf32>
    %245 = vector.extract_strided_slice %242 {offsets = [0, 32], sizes = [8, 32], strides = [1, 1]} : vector<8x128xf32> to vector<8x32xf32>
    %246 = vector.extract_strided_slice %243 {offsets = [0, 64], sizes = [8, 32], strides = [1, 1]} : vector<8x128xf32> to vector<8x32xf32>
    %247 = vector.extract_strided_slice %242 {offsets = [0, 96], sizes = [8, 32], strides = [1, 1]} : vector<8x128xf32> to vector<8x32xf32>
    %248 = arith.mulf %245, %213 : vector<8x32xf32>
    %249 = arith.mulf %244, %246 : vector<8x32xf32>
    %250 = arith.addf %248, %249 : vector<8x32xf32>
    %251 = math.tanh %250 : vector<8x32xf32>
    %252 = arith.mulf %247, %251 : vector<8x32xf32>
    %cst_46 = arith.constant dense<0.000000e+00> : vector<8x128xf32>
    %253 = tpu.matmul %252, %3, %cst_46 {dimension_numbers = #tpu.dot_dimension_numbers<[1], [0], [0], [1], [0, 0, 1, 1], [], []>} : vector<8x32xf32>, vector<32x128xf32>, vector<8x128xf32> -> vector<8x128xf32>
    %cst_47 = arith.constant dense<0.000000e+00> : vector<8x128xf32>
    %254 = tpu.matmul %234, %4, %cst_47 {dimension_numbers = #tpu.dot_dimension_numbers<[1], [0], [0], [1], [0, 0, 1, 1], [], []>} : vector<8x32xf32>, vector<32x128xf32>, vector<8x128xf32> -> vector<8x128xf32>
    %255 = arith.addf %253, %254 : vector<8x128xf32>
    %256 = arith.addf %255, %11 : vector<8x128xf32>
    %257 = arith.negf %256 : vector<8x128xf32>
    %258 = math.exp %257 : vector<8x128xf32>
    %cst_48 = arith.constant 1.000000e+00 : f32
    %259 = vector.broadcast %cst_48 : f32 to vector<8x128xf32>
    %260 = arith.addf %259, %258 : vector<8x128xf32>
    %261 = arith.divf %259, %260 : vector<8x128xf32>
    %262 = math.tanh %256 : vector<8x128xf32>
    %263 = vector.extract_strided_slice %261 {offsets = [0, 0], sizes = [8, 32], strides = [1, 1]} : vector<8x128xf32> to vector<8x32xf32>
    %264 = vector.extract_strided_slice %261 {offsets = [0, 32], sizes = [8, 32], strides = [1, 1]} : vector<8x128xf32> to vector<8x32xf32>
    %265 = vector.extract_strided_slice %262 {offsets = [0, 64], sizes = [8, 32], strides = [1, 1]} : vector<8x128xf32> to vector<8x32xf32>
    %266 = vector.extract_strided_slice %261 {offsets = [0, 96], sizes = [8, 32], strides = [1, 1]} : vector<8x128xf32> to vector<8x32xf32>
    %267 = arith.mulf %264, %232 : vector<8x32xf32>
    %268 = arith.mulf %263, %265 : vector<8x32xf32>
    %269 = arith.addf %267, %268 : vector<8x32xf32>
    %270 = math.tanh %269 : vector<8x32xf32>
    %271 = arith.mulf %266, %270 : vector<8x32xf32>
    %272 = vector.extract_strided_slice %8 {offsets = [56, 0], sizes = [8, 128], strides = [1, 1]} : vector<64x128xf32> to vector<8x128xf32>
    %cst_49 = arith.constant dense<0.000000e+00> : vector<8x128xf32>
    %273 = tpu.matmul %252, %1, %cst_49 {dimension_numbers = #tpu.dot_dimension_numbers<[1], [0], [0], [1], [0, 0, 1, 1], [], []>} : vector<8x32xf32>, vector<32x128xf32>, vector<8x128xf32> -> vector<8x128xf32>
    %274 = arith.addf %272, %273 : vector<8x128xf32>
    %275 = arith.negf %274 : vector<8x128xf32>
    %276 = math.exp %275 : vector<8x128xf32>
    %cst_50 = arith.constant 1.000000e+00 : f32
    %277 = vector.broadcast %cst_50 : f32 to vector<8x128xf32>
    %278 = arith.addf %277, %276 : vector<8x128xf32>
    %279 = arith.divf %277, %278 : vector<8x128xf32>
    %280 = math.tanh %274 : vector<8x128xf32>
    %281 = vector.extract_strided_slice %279 {offsets = [0, 0], sizes = [8, 32], strides = [1, 1]} : vector<8x128xf32> to vector<8x32xf32>
    %282 = vector.extract_strided_slice %279 {offsets = [0, 32], sizes = [8, 32], strides = [1, 1]} : vector<8x128xf32> to vector<8x32xf32>
    %283 = vector.extract_strided_slice %280 {offsets = [0, 64], sizes = [8, 32], strides = [1, 1]} : vector<8x128xf32> to vector<8x32xf32>
    %284 = vector.extract_strided_slice %279 {offsets = [0, 96], sizes = [8, 32], strides = [1, 1]} : vector<8x128xf32> to vector<8x32xf32>
    %285 = arith.mulf %282, %250 : vector<8x32xf32>
    %286 = arith.mulf %281, %283 : vector<8x32xf32>
    %287 = arith.addf %285, %286 : vector<8x32xf32>
    %288 = math.tanh %287 : vector<8x32xf32>
    %289 = arith.mulf %284, %288 : vector<8x32xf32>
    %cst_51 = arith.constant dense<0.000000e+00> : vector<8x128xf32>
    %290 = tpu.matmul %289, %3, %cst_51 {dimension_numbers = #tpu.dot_dimension_numbers<[1], [0], [0], [1], [0, 0, 1, 1], [], []>} : vector<8x32xf32>, vector<32x128xf32>, vector<8x128xf32> -> vector<8x128xf32>
    %cst_52 = arith.constant dense<0.000000e+00> : vector<8x128xf32>
    %291 = tpu.matmul %271, %4, %cst_52 {dimension_numbers = #tpu.dot_dimension_numbers<[1], [0], [0], [1], [0, 0, 1, 1], [], []>} : vector<8x32xf32>, vector<32x128xf32>, vector<8x128xf32> -> vector<8x128xf32>
    %292 = arith.addf %290, %291 : vector<8x128xf32>
    %293 = arith.addf %292, %11 : vector<8x128xf32>
    %294 = arith.negf %293 : vector<8x128xf32>
    %295 = math.exp %294 : vector<8x128xf32>
    %cst_53 = arith.constant 1.000000e+00 : f32
    %296 = vector.broadcast %cst_53 : f32 to vector<8x128xf32>
    %297 = arith.addf %296, %295 : vector<8x128xf32>
    %298 = arith.divf %296, %297 : vector<8x128xf32>
    %299 = math.tanh %293 : vector<8x128xf32>
    %300 = vector.extract_strided_slice %298 {offsets = [0, 0], sizes = [8, 32], strides = [1, 1]} : vector<8x128xf32> to vector<8x32xf32>
    %301 = vector.extract_strided_slice %298 {offsets = [0, 32], sizes = [8, 32], strides = [1, 1]} : vector<8x128xf32> to vector<8x32xf32>
    %302 = vector.extract_strided_slice %299 {offsets = [0, 64], sizes = [8, 32], strides = [1, 1]} : vector<8x128xf32> to vector<8x32xf32>
    %303 = vector.extract_strided_slice %298 {offsets = [0, 96], sizes = [8, 32], strides = [1, 1]} : vector<8x128xf32> to vector<8x32xf32>
    %304 = arith.mulf %301, %269 : vector<8x32xf32>
    %305 = arith.mulf %300, %302 : vector<8x32xf32>
    %306 = arith.addf %304, %305 : vector<8x32xf32>
    %307 = math.tanh %306 : vector<8x32xf32>
    %308 = arith.mulf %303, %307 : vector<8x32xf32>
    %c0_54 = arith.constant 0 : index
    %c0_55 = arith.constant 0 : index
    %309 = vector.load %arg8[%c0_54, %c0_55] : memref<32x1xf32, #tpu.memory_space<vmem>>, vector<32x1xf32>
    %cst_56 = arith.constant dense<0.000000e+00> : vector<8x1xf32>
    %310 = tpu.matmul %308, %309, %cst_56 {dimension_numbers = #tpu.dot_dimension_numbers<[1], [0], [0], [1], [0, 0, 1, 1], [], []>} : vector<8x32xf32>, vector<32x1xf32>, vector<8x1xf32> -> vector<8x1xf32>
    %c0_57 = arith.constant 0 : index
    %c0_58 = arith.constant 0 : index
    %311 = vector.load %arg9[%c0_57, %c0_58] : memref<1x1xf32, #tpu.memory_space<vmem>>, vector<1x1xf32>
    %312 = vector.broadcast %311 : vector<1x1xf32> to vector<8x1xf32>
    %313 = arith.addf %310, %312 : vector<8x1xf32>
    %c0_59 = arith.constant 0 : index
    %c0_60 = arith.constant 0 : index
    %314 = vector.load %arg10[%c0_59, %c0_60] : memref<8x1xf32, #tpu.memory_space<vmem>>, vector<8x1xf32>
    tpu.vector_store %arg10[%c0_59, %c0_60], %313 {strides = array<i32>} : memref<8x1xf32, #tpu.memory_space<vmem>>, vector<8x1xf32>,
    return
  }
  func.func @transform_0(%arg0: i32) -> (i32, i32) {
    %c0_i32 = arith.constant 0 : i32
    %c0_i32_0 = arith.constant 0 : i32
    %c0_i32_1 = arith.constant 0 : i32
    return %c0_i32, %c0_i32_0 : i32, i32
  }
  func.func @transform_1(%arg0: i32) -> (i32, i32) {
    %c0_i32 = arith.constant 0 : i32
    %c0_i32_0 = arith.constant 0 : i32
    %c0_i32_1 = arith.constant 0 : i32
    return %c0_i32, %c0_i32_0 : i32, i32
  }
  func.func @transform_2(%arg0: i32) -> (i32, i32) {
    %c0_i32 = arith.constant 0 : i32
    %c0_i32_0 = arith.constant 0 : i32
    %c0_i32_1 = arith.constant 0 : i32
    return %c0_i32, %c0_i32_0 : i32, i32
  }
  func.func @transform_3(%arg0: i32) -> (i32, i32) {
    %c0_i32 = arith.constant 0 : i32
    %c0_i32_0 = arith.constant 0 : i32
    %c0_i32_1 = arith.constant 0 : i32
    return %c0_i32, %c0_i32_0 : i32, i32
  }
  func.func @transform_4(%arg0: i32) -> (i32, i32) {
    %c0_i32 = arith.constant 0 : i32
    %c0_i32_0 = arith.constant 0 : i32
    %c0_i32_1 = arith.constant 0 : i32
    return %c0_i32, %c0_i32_0 : i32, i32
  }
  func.func @transform_5(%arg0: i32) -> (i32, i32) {
    %c0_i32 = arith.constant 0 : i32
    %c0_i32_0 = arith.constant 0 : i32
    %c0_i32_1 = arith.constant 0 : i32
    return %c0_i32, %c0_i32_0 : i32, i32
  }
  func.func @transform_6(%arg0: i32) -> (i32, i32) {
    %c0_i32 = arith.constant 0 : i32
    %c0_i32_0 = arith.constant 0 : i32
    %c0_i32_1 = arith.constant 0 : i32
    return %c0_i32, %c0_i32_0 : i32, i32
  }
  func.func @transform_7(%arg0: i32) -> (i32, i32) {
    %c0_i32 = arith.constant 0 : i32
    %c0_i32_0 = arith.constant 0 : i32
    %c0_i32_1 = arith.constant 0 : i32
    return %c0_i32, %c0_i32_0 : i32, i32
  }
  func.func @transform_8(%arg0: i32) -> (i32, i32) {
    %c0_i32 = arith.constant 0 : i32
    %c0_i32_0 = arith.constant 0 : i32
    %c0_i32_1 = arith.constant 0 : i32
    return %c0_i32, %c0_i32_0 : i32, i32
  }
  func.func @transform_9(%arg0: i32) -> (i32, i32) {
    %c0_i32 = arith.constant 0 : i32
    %c0_i32_0 = arith.constant 0 : i32
    %c0_i32_1 = arith.constant 0 : i32
    return %c0_i32, %c0_i32_0 : i32, i32
  }
}

</mosaic_0001>

<llo_original>
// kernel: tpu_custom_call.1
$region0: #{tpu_custom_call.1}
  #allocation0 [shape = 'u32[]', space=smem, size = 0x4, offset = 0x4, fixed_abs, tag = 'smem constant byte address 0x4 - core index']
  #allocation1 [shape = 'u32[144,128]{1,0:T(1,128)}', space=vmem, size = 0x12000, scoped, tag = 'internal scratch']
  #allocation2 [shape = 'f32[1,1]{1,0:T(1,128)S(1)}', space=vmem, size = 0x200, scoped, tag = 'scoped memory for tpu_custom_call.1']
  %s0 = inlined_call_operand.vmem [shape: f32[64,4], index: 0, kind: input, shape index: {}]
  %s1 = inlined_call_operand.vmem [shape: f32[4,128], index: 1, kind: input, shape index: {}]
  %s2 = inlined_call_operand.vmem [shape: f32[32,128], index: 2, kind: input, shape index: {}]
  %s3 = inlined_call_operand.vmem [shape: f32[1,128], index: 3, kind: input, shape index: {}]
  %s4 = inlined_call_operand.vmem [shape: f32[32,128], index: 4, kind: input, shape index: {}]
  %s5 = inlined_call_operand.vmem [shape: f32[32,128], index: 5, kind: input, shape index: {}]
  %s6 = inlined_call_operand.vmem [shape: f32[1,128], index: 6, kind: input, shape index: {}]
  %s7 = inlined_call_operand.vmem [shape: f32[32,1], index: 7, kind: input, shape index: {}]
  %s8 = inlined_call_operand.<no memory space> [shape: f32[1,1], index: 8, kind: input, shape index: {}]
  %s9 = inlined_call_operand.vmem [shape: f32[8,1], index: 9, kind: output, shape index: {}]
  %s10 = sld [smem:[#allocation0]]
  $region46: #{tpu_custom_call.1} parent=0
    _
  %s12 = ssub.s32 1, %s10
  %s13 = scalar_select 0, %s12, %s10
  %v14 = vstv %s8
  %15 = vst [vmem:[#allocation2] sm:$0x1] %v14
  // Predicated region
  $region2: #{tpu_custom_call.1} parent=0 // pred_check
    _
  $region3: #{tpu_custom_call.1} parent=0 // pred_check_branch
    %17 = sbr.rel (0) target = $region5
  $region4: #{tpu_custom_call.1} parent=0 // pred_region
    _
  $region5: #{tpu_custom_call.1} parent=0 // pred_fallthru
    _
  // Predicated region
  $region6: #{tpu_custom_call.1} parent=0 // pred_check
    _
  $region7: #{tpu_custom_call.1} parent=0 // pred_check_branch
    %19 = sbr.rel (0) target = $region9
  $region8: #{tpu_custom_call.1} parent=0 // pred_region
    _
  $region9: #{tpu_custom_call.1} parent=0 // pred_fallthru
    _
  // Predicated region
  $region10: #{tpu_custom_call.1} parent=0 // pred_check
    _
  $region11: #{tpu_custom_call.1} parent=0 // pred_check_branch
    %21 = sbr.rel (0) target = $region13
  $region12: #{tpu_custom_call.1} parent=0 // pred_region
    _
  $region13: #{tpu_custom_call.1} parent=0 // pred_fallthru
    _
  // Predicated region
  $region14: #{tpu_custom_call.1} parent=0 // pred_check
    _
  $region15: #{tpu_custom_call.1} parent=0 // pred_check_branch
    %23 = sbr.rel (0) target = $region17
  $region16: #{tpu_custom_call.1} parent=0 // pred_region
    _
  $region17: #{tpu_custom_call.1} parent=0 // pred_fallthru
    _
  // Predicated region
  $region18: #{tpu_custom_call.1} parent=0 // pred_check
    _
  $region19: #{tpu_custom_call.1} parent=0 // pred_check_branch
    %25 = sbr.rel (0) target = $region21
  $region20: #{tpu_custom_call.1} parent=0 // pred_region
    _
  $region21: #{tpu_custom_call.1} parent=0 // pred_fallthru
    _
  // Predicated region
  $region22: #{tpu_custom_call.1} parent=0 // pred_check
    _
  $region23: #{tpu_custom_call.1} parent=0 // pred_check_branch
    %27 = sbr.rel (0) target = $region25
  $region24: #{tpu_custom_call.1} parent=0 // pred_region
    _
  $region25: #{tpu_custom_call.1} parent=0 // pred_fallthru
    _
  // Predicated region
  $region26: #{tpu_custom_call.1} parent=0 // pred_check
    _
  $region27: #{tpu_custom_call.1} parent=0 // pred_check_branch
    %29 = sbr.rel (0) target = $region29
  $region28: #{tpu_custom_call.1} parent=0 // pred_region
    _
  $region29: #{tpu_custom_call.1} parent=0 // pred_fallthru
    _
  // Predicated region
  $region30: #{tpu_custom_call.1} parent=0 // pred_check
    _
  $region31: #{tpu_custom_call.1} parent=0 // pred_check_branch
    %31 = sbr.rel (0) target = $region33
  $region32: #{tpu_custom_call.1} parent=0 // pred_region
    _
  $region33: #{tpu_custom_call.1} parent=0 // pred_fallthru
    _
  // Predicated region
  $region34: #{tpu_custom_call.1} parent=0 // pred_check
    _
  $region35: #{tpu_custom_call.1} parent=0 // pred_check_branch
    %33 = sbr.rel (0) target = $region37
  $region36: #{tpu_custom_call.1} parent=0 // pred_region
    _
  $region37: #{tpu_custom_call.1} parent=0 // pred_fallthru
    _
  %v34 = vld [vmem:[%s1] sm:$0xf]
  %v35 = vld [vmem:[%s2] sm:$0xff]
  %v36 = vld [vmem:[%s2 + $0x8] sm:$0xff]
  %v37 = vld [vmem:[%s2 + $0x10] sm:$0xff]
  %v38 = vld [vmem:[%s2 + $0x18] sm:$0xff]
  %v39 = vld [vmem:[%s3] sm:$0x1]
  %v40 = vld [vmem:[%s4] sm:$0xff]
  %v41 = vld [vmem:[%s4 + $0x8] sm:$0xff]
  %v42 = vld [vmem:[%s4 + $0x10] sm:$0xff]
  %v43 = vld [vmem:[%s4 + $0x18] sm:$0xff]
  %v44 = vld [vmem:[%s5] sm:$0xff]
  %v45 = vld [vmem:[%s5 + $0x8] sm:$0xff]
  %v46 = vld [vmem:[%s5 + $0x10] sm:$0xff]
  %v47 = vld [vmem:[%s5 + $0x18] sm:$0xff]
  %v48 = vld [vmem:[%s0] sm:$0xff]
  %v49 = vld [vmem:[%s0 + $0x8] sm:$0xff]
  %v50 = vld [vmem:[%s0 + $0x10] sm:$0xff]
  %v51 = vld [vmem:[%s0 + $0x18] sm:$0xff]
  %v52 = vld [vmem:[%s0 + $0x20] sm:$0xff]
  %v53 = vld [vmem:[%s0 + $0x28] sm:$0xff]
  %v54 = vld [vmem:[%s0 + $0x30] sm:$0xff]
  %v55 = vld [vmem:[%s0 + $0x38] sm:$0xff]
  %v57 = vlaneseq
  %v58 = vshrl.u32 %v57, 7
  %v59 = vsub.s32 0, %v58
  %v60 = vrot.slane %v39, %v59
  %vm62 = vcmask 31744
  %v64 = vsel %vm62, %v48, 0
  %v67 = vsel %vm62, %v49, 0
  %v70 = vsel %vm62, %v50, 0
  %v73 = vsel %vm62, %v51, 0
  %v76 = vsel %vm62, %v52, 0
  %v79 = vsel %vm62, %v53, 0
  %v82 = vsel %vm62, %v54, 0
  %v85 = vsel %vm62, %v55, 0
  %vm87 = vcmask 1043456
  %v89 = vsel %vm87, %v34, 0
  %91 = vmatprep.subr.mxu0 0.0
  %92 = vmatpush1.msra.mxu0 %v89
  %93 = vmatprep.subr.mxu0 0.0
  %94 = vmatpush1.msra.mxu0 0.0
  %95 = vmatprep.subr.mxu0 0.0
  %96 = vmatpush1.msra.mxu0 0.0
  %97 = vmatprep.subr.mxu0 0.0
  %98 = vmatpush1.msra.mxu0 0.0
  %99 = vmatprep.subr.mxu0 0.0
  %100 = vmatpush1.msra.mxu0 0.0
  %101 = vmatprep.subr.mxu0 0.0
  %102 = vmatpush1.msra.mxu0 0.0
  %103 = vmatprep.subr.mxu0 0.0
  %104 = vmatpush1.msra.mxu0 0.0
  %105 = vmatprep.subr.mxu0 0.0
  %106 = vmatpush1.msra.mxu0 0.0
  %107 = vmatprep.subr.mxu0 0.0
  %108 = vmatpush1.msra.mxu0 0.0
  %109 = vmatprep.subr.mxu0 0.0
  %110 = vmatpush1.msra.mxu0 0.0
  %111 = vmatprep.subr.mxu0 0.0
  %112 = vmatpush1.msra.mxu0 0.0
  %113 = vmatprep.subr.mxu0 0.0
  %114 = vmatpush1.msra.mxu0 0.0
  %115 = vmatprep.subr.mxu0 0.0
  %116 = vmatpush1.msra.mxu0 0.0
  %117 = vmatprep.subr.mxu0 0.0
  %118 = vmatpush1.msra.mxu0 0.0
  %119 = vmatprep.subr.mxu0 0.0
  %120 = vmatpush1.msra.mxu0 0.0
  %121 = vmatprep.subr.mxu0 0.0
  %122 = vmatpush1.msra.mxu0 0.0
  %123 = vmatprep.subr.mxu0 0.0
  %124 = vmatpush1.msra.mxu0 0.0
  %125 = vmatprep.subr.mxu0 0.0
  %126 = vmatpush1.msra.mxu0 0.0
  %127 = vmatprep.subr.mxu0 0.0
  %128 = vmatpush1.msra.mxu0 0.0
  %129 = vmatprep.subr.mxu0 0.0
  %130 = vmatpush1.msra.mxu0 0.0
  %131 = vmatprep.subr.mxu0 0.0
  %132 = vmatpush1.msra.mxu0 0.0
  %133 = vmatprep.subr.mxu0 0.0
  %134 = vmatpush1.msra.mxu0 0.0
  %135 = vmatprep.subr.mxu0 0.0
  %136 = vmatpush1.msra.mxu0 0.0
  %137 = vmatprep.subr.mxu0 0.0
  %138 = vmatpush1.msra.mxu0 0.0
  %139 = vmatprep.subr.mxu0 0.0
  %140 = vmatpush1.msra.mxu0 0.0
  %141 = vmatprep.subr.mxu0 0.0
  %142 = vmatpush1.msra.mxu0 0.0
  %143 = vmatprep.subr.mxu0 0.0
  %144 = vmatpush1.msra.mxu0 0.0
  %145 = vmatprep.subr.mxu0 0.0
  %146 = vmatpush1.msra.mxu0 0.0
  %147 = vmatprep.subr.mxu0 0.0
  %148 = vmatpush1.msra.mxu0 0.0
  %149 = vmatprep.subr.mxu0 0.0
  %150 = vmatpush1.msra.mxu0 0.0
  %151 = vmatprep.subr.mxu0 0.0
  %152 = vmatpush1.msra.mxu0 0.0
  %153 = vmatprep.subr.mxu0 0.0
  %154 = vmatpush1.msra.mxu0 0.0
  %155 = vmatprep.mubr.f32.mxu0 0.0
  %156 = vmatmul.mubr.f32.gmra.mrb[0].mxu0 %v64
  %v157 = vpop.f32.mrb[0].mxu0
  %v158 = vadd.f32 %v60, %v157
  %v159 = vpop.f32.mrb[0].mxu0
  %160 = vmatprep.mubr.f32.mxu0 0.0
  %161 = vmatmul.mubr.f32.gmra.mrb[0].mxu0 %v67
  %v162 = vpop.f32.mrb[0].mxu0
  %v163 = vadd.f32 %v60, %v162
  %v164 = vpop.f32.mrb[0].mxu0
  %165 = vmatprep.mubr.f32.mxu0 0.0
  %166 = vmatmul.mubr.f32.gmra.mrb[0].mxu0 %v70
  %v167 = vpop.f32.mrb[0].mxu0
  %v168 = vadd.f32 %v60, %v167
  %v169 = vpop.f32.mrb[0].mxu0
  %170 = vmatprep.mubr.f32.mxu0 0.0
  %171 = vmatmul.mubr.f32.gmra.mrb[0].mxu0 %v73
  %v172 = vpop.f32.mrb[0].mxu0
  %v173 = vadd.f32 %v60, %v172
  %v174 = vpop.f32.mrb[0].mxu0
  %175 = vmatprep.mubr.f32.mxu0 0.0
  %176 = vmatmul.mubr.f32.gmra.mrb[0].mxu0 %v76
  %v177 = vpop.f32.mrb[0].mxu0
  %v178 = vadd.f32 %v60, %v177
  %v179 = vpop.f32.mrb[0].mxu0
  %180 = vmatprep.mubr.f32.mxu0 0.0
  %181 = vmatmul.mubr.f32.gmra.mrb[0].mxu0 %v79
  %v182 = vpop.f32.mrb[0].mxu0
  %v183 = vadd.f32 %v60, %v182
  %v184 = vpop.f32.mrb[0].mxu0
  %185 = vmatprep.mubr.f32.mxu0 0.0
  %186 = vmatmul.mubr.f32.gmra.mrb[0].mxu0 %v82
  %v187 = vpop.f32.mrb[0].mxu0
  %v188 = vadd.f32 %v60, %v187
  %v189 = vpop.f32.mrb[0].mxu0
  %190 = vmatprep.mubr.f32.mxu0 0.0
  %191 = vmatmul.mubr.f32.gmra.mrb[0].mxu0 %v85
  %v192 = vpop.f32.mrb[0].mxu0
  %v193 = vadd.f32 %v60, %v192
  %v194 = vpop.f32.mrb[0].mxu0
  %195 = vdwg.mxu0
  %v196 = vld [vmem:[%s6] sm:$0x1]
  %v198 = vlaneseq
  %v199 = vshrl.u32 %v198, 7
  %v200 = vsub.s32 0, %v199
  %v201 = vrot.slane %v196, %v200
  %vm203 = vcmask 261120
  %v205 = vsel %vm203, 0.0, 0
  %207 = vmatprep.subr.mxu0 0.0
  %208 = vmatpush1.msra.mxu0 %v35
  %209 = vmatprep.subr.mxu0 0.0
  %210 = vmatpush1.msra.mxu0 %v36
  %211 = vmatprep.subr.mxu0 0.0
  %212 = vmatpush1.msra.mxu0 %v37
  %213 = vmatprep.subr.mxu0 0.0
  %214 = vmatpush1.msra.mxu0 %v38
  %215 = vmatprep.subr.mxu0 0.0
  %216 = vmatpush1.msra.mxu0 0.0
  %217 = vmatprep.subr.mxu0 0.0
  %218 = vmatpush1.msra.mxu0 0.0
  %219 = vmatprep.subr.mxu0 0.0
  %220 = vmatpush1.msra.mxu0 0.0
  %221 = vmatprep.subr.mxu0 0.0
  %222 = vmatpush1.msra.mxu0 0.0
  %223 = vmatprep.subr.mxu0 0.0
  %224 = vmatpush1.msra.mxu0 0.0
  %225 = vmatprep.subr.mxu0 0.0
  %226 = vmatpush1.msra.mxu0 0.0
  %227 = vmatprep.subr.mxu0 0.0
  %228 = vmatpush1.msra.mxu0 0.0
  %229 = vmatprep.subr.mxu0 0.0
  %230 = vmatpush1.msra.mxu0 0.0
  %231 = vmatprep.subr.mxu0 0.0
  %232 = vmatpush1.msra.mxu0 0.0
  %233 = vmatprep.subr.mxu0 0.0
  %234 = vmatpush1.msra.mxu0 0.0
  %235 = vmatprep.subr.mxu0 0.0
  %236 = vmatpush1.msra.mxu0 0.0
  %237 = vmatprep.subr.mxu0 0.0
  %238 = vmatpush1.msra.mxu0 0.0
  %239 = vmatprep.subr.mxu0 0.0
  %240 = vmatpush1.msra.mxu0 0.0
  %241 = vmatprep.subr.mxu0 0.0
  %242 = vmatpush1.msra.mxu0 0.0
  %243 = vmatprep.subr.mxu0 0.0
  %244 = vmatpush1.msra.mxu0 0.0
  %245 = vmatprep.subr.mxu0 0.0
  %246 = vmatpush1.msra.mxu0 0.0
  %247 = vmatprep.subr.mxu0 0.0
  %248 = vmatpush1.msra.mxu0 0.0
  %249 = vmatprep.subr.mxu0 0.0
  %250 = vmatpush1.msra.mxu0 0.0
  %251 = vmatprep.subr.mxu0 0.0
  %252 = vmatpush1.msra.mxu0 0.0
  %253 = vmatprep.subr.mxu0 0.0
  %254 = vmatpush1.msra.mxu0 0.0
  %255 = vmatprep.subr.mxu0 0.0
  %256 = vmatpush1.msra.mxu0 0.0
  %257 = vmatprep.subr.mxu0 0.0
  %258 = vmatpush1.msra.mxu0 0.0
  %259 = vmatprep.subr.mxu0 0.0
  %260 = vmatpush1.msra.mxu0 0.0
  %261 = vmatprep.subr.mxu0 0.0
  %262 = vmatpush1.msra.mxu0 0.0
  %263 = vmatprep.subr.mxu0 0.0
  %264 = vmatpush1.msra.mxu0 0.0
  %265 = vmatprep.subr.mxu0 0.0
  %266 = vmatpush1.msra.mxu0 0.0
  %267 = vmatprep.subr.mxu0 0.0
  %268 = vmatpush1.msra.mxu0 0.0
  %269 = vmatprep.subr.mxu0 0.0
  %270 = vmatpush1.msra.mxu0 0.0
  %271 = vmatprep.mubr.f32.mxu0 0.0
  %272 = vmatmul.mubr.f32.gmra.mrb[0].mxu0 %v205
  %v273 = vpop.f32.mrb[0].mxu0
  %v274 = vadd.f32 0.0, %v273
  %v275 = vpop.f32.mrb[0].mxu0
  %276 = vdwg.mxu0
  %v277 = vadd.f32 %v158, %v274
  %v278 = vxor.u32 %v277, 2147483648
  %v279 = vmul.f32 %v278, 1.442695
  %v280 = vpow.pop %v279
  %v281 = vadd.f32 %v280, 1.0
  %v282 = vrcp.pop %v281
  %v283 = vmul.f32 1.0, %v282
  %v284 = vtanh.pop %v277
  %v285 = vmul.f32 %v283, 0.0
  %287 = vrot.lane.b32.xlu0 %v284, 64
  %v288 = vpop.permute.xlu0 %287
  %v290 = vmul.f32 %v283, %v288
  %292 = vrot.lane.b32.xlu0 %v290, 32
  %v293 = vpop.permute.xlu0 %292
  %v295 = vadd.f32 %v285, %v293
  %v296 = vtanh.pop %v295
  %298 = vrot.lane.b32.xlu0 %v296, 64
  %v299 = vpop.permute.xlu0 %298
  %v301 = vmul.f32 %v283, %v299
  %302 = vmatprep.subr.mxu0 0.0
  %303 = vmatpush1.msra.mxu0 %v44
  %304 = vmatprep.subr.mxu0 0.0
  %305 = vmatpush1.msra.mxu0 %v45
  %306 = vmatprep.subr.mxu0 0.0
  %307 = vmatpush1.msra.mxu0 %v46
  %308 = vmatprep.subr.mxu0 0.0
  %309 = vmatpush1.msra.mxu0 %v47
  %310 = vmatprep.subr.mxu0 0.0
  %311 = vmatpush1.msra.mxu0 0.0
  %312 = vmatprep.subr.mxu0 0.0
  %313 = vmatpush1.msra.mxu0 0.0
  %314 = vmatprep.subr.mxu0 0.0
  %315 = vmatpush1.msra.mxu0 0.0
  %316 = vmatprep.subr.mxu0 0.0
  %317 = vmatpush1.msra.mxu0 0.0
  %318 = vmatprep.subr.mxu0 0.0
  %319 = vmatpush1.msra.mxu0 0.0
  %320 = vmatprep.subr.mxu0 0.0
  %321 = vmatpush1.msra.mxu0 0.0
  %322 = vmatprep.subr.mxu0 0.0
  %323 = vmatpush1.msra.mxu0 0.0
  %324 = vmatprep.subr.mxu0 0.0
  %325 = vmatpush1.msra.mxu0 0.0
  %326 = vmatprep.subr.mxu0 0.0
  %327 = vmatpush1.msra.mxu0 0.0
  %328 = vmatprep.subr.mxu0 0.0
  %329 = vmatpush1.msra.mxu0 0.0
  %330 = vmatprep.subr.mxu0 0.0
  %331 = vmatpush1.msra.mxu0 0.0
  %332 = vmatprep.subr.mxu0 0.0
  %333 = vmatpush1.msra.mxu0 0.0
  %334 = vmatprep.subr.mxu0 0.0
  %335 = vmatpush1.msra.mxu0 0.0
  %336 = vmatprep.subr.mxu0 0.0
  %337 = vmatpush1.msra.mxu0 0.0
  %338 = vmatprep.subr.mxu0 0.0
  %339 = vmatpush1.msra.mxu0 0.0
  %340 = vmatprep.subr.mxu0 0.0
  %341 = vmatpush1.msra.mxu0 0.0
  %342 = vmatprep.subr.mxu0 0.0
  %343 = vmatpush1.msra.mxu0 0.0
  %344 = vmatprep.subr.mxu0 0.0
  %345 = vmatpush1.msra.mxu0 0.0
  %346 = vmatprep.subr.mxu0 0.0
  %347 = vmatpush1.msra.mxu0 0.0
  %348 = vmatprep.subr.mxu0 0.0
  %349 = vmatpush1.msra.mxu0 0.0
  %350 = vmatprep.subr.mxu0 0.0
  %351 = vmatpush1.msra.mxu0 0.0
  %352 = vmatprep.subr.mxu0 0.0
  %353 = vmatpush1.msra.mxu0 0.0
  %354 = vmatprep.subr.mxu0 0.0
  %355 = vmatpush1.msra.mxu0 0.0
  %356 = vmatprep.subr.mxu0 0.0
  %357 = vmatpush1.msra.mxu0 0.0
  %358 = vmatprep.subr.mxu0 0.0
  %359 = vmatpush1.msra.mxu0 0.0
  %360 = vmatprep.subr.mxu0 0.0
  %361 = vmatpush1.msra.mxu0 0.0
  %362 = vmatprep.subr.mxu0 0.0
  %363 = vmatpush1.msra.mxu0 0.0
  %364 = vmatprep.subr.mxu0 0.0
  %365 = vmatpush1.msra.mxu0 0.0
  %366 = vmatprep.mubr.f32.mxu0 0.0
  %367 = vmatmul.mubr.f32.gmra.mrb[0].mxu0 %v205
  %v368 = vpop.f32.mrb[0].mxu0
  %v369 = vadd.f32 0.0, %v368
  %v370 = vpop.f32.mrb[0].mxu0
  %371 = vdwg.mxu0
  %373 = vrot.lane.b32.xlu0 %v301, 32
  %v374 = vpop.permute.xlu0 %373
  %v375 = vsel %vm203, %v374, 0
  %377 = vmatprep.subr.mxu0 0.0
  %378 = vmatpush1.msra.mxu0 %v40
  %379 = vmatprep.subr.mxu0 0.0
  %380 = vmatpush1.msra.mxu0 %v41
  %381 = vmatprep.subr.mxu0 0.0
  %382 = vmatpush1.msra.mxu0 %v42
  %383 = vmatprep.subr.mxu0 0.0
  %384 = vmatpush1.msra.mxu0 %v43
  %385 = vmatprep.subr.mxu0 0.0
  %386 = vmatpush1.msra.mxu0 0.0
  %387 = vmatprep.subr.mxu0 0.0
  %388 = vmatpush1.msra.mxu0 0.0
  %389 = vmatprep.subr.mxu0 0.0
  %390 = vmatpush1.msra.mxu0 0.0
  %391 = vmatprep.subr.mxu0 0.0
  %392 = vmatpush1.msra.mxu0 0.0
  %393 = vmatprep.subr.mxu0 0.0
  %394 = vmatpush1.msra.mxu0 0.0
  %395 = vmatprep.subr.mxu0 0.0
  %396 = vmatpush1.msra.mxu0 0.0
  %397 = vmatprep.subr.mxu0 0.0
  %398 = vmatpush1.msra.mxu0 0.0
  %399 = vmatprep.subr.mxu0 0.0
  %400 = vmatpush1.msra.mxu0 0.0
  %401 = vmatprep.subr.mxu0 0.0
  %402 = vmatpush1.msra.mxu0 0.0
  %403 = vmatprep.subr.mxu0 0.0
  %404 = vmatpush1.msra.mxu0 0.0
  %405 = vmatprep.subr.mxu0 0.0
  %406 = vmatpush1.msra.mxu0 0.0
  %407 = vmatprep.subr.mxu0 0.0
  %408 = vmatpush1.msra.mxu0 0.0
  %409 = vmatprep.subr.mxu0 0.0
  %410 = vmatpush1.msra.mxu0 0.0
  %411 = vmatprep.subr.mxu0 0.0
  %412 = vmatpush1.msra.mxu0 0.0
  %413 = vmatprep.subr.mxu0 0.0
  %414 = vmatpush1.msra.mxu0 0.0
  %415 = vmatprep.subr.mxu0 0.0
  %416 = vmatpush1.msra.mxu0 0.0
  %417 = vmatprep.subr.mxu0 0.0
  %418 = vmatpush1.msra.mxu0 0.0
  %419 = vmatprep.subr.mxu0 0.0
  %420 = vmatpush1.msra.mxu0 0.0
  %421 = vmatprep.subr.mxu0 0.0
  %422 = vmatpush1.msra.mxu0 0.0
  %423 = vmatprep.subr.mxu0 0.0
  %424 = vmatpush1.msra.mxu0 0.0
  %425 = vmatprep.subr.mxu0 0.0
  %426 = vmatpush1.msra.mxu0 0.0
  %427 = vmatprep.subr.mxu0 0.0
  %428 = vmatpush1.msra.mxu0 0.0
  %429 = vmatprep.subr.mxu0 0.0
  %430 = vmatpush1.msra.mxu0 0.0
  %431 = vmatprep.subr.mxu0 0.0
  %432 = vmatpush1.msra.mxu0 0.0
  %433 = vmatprep.subr.mxu0 0.0
  %434 = vmatpush1.msra.mxu0 0.0
  %435 = vmatprep.subr.mxu0 0.0
  %436 = vmatpush1.msra.mxu0 0.0
  %437 = vmatprep.subr.mxu0 0.0
  %438 = vmatpush1.msra.mxu0 0.0
  %439 = vmatprep.subr.mxu0 0.0
  %440 = vmatpush1.msra.mxu0 0.0
  %441 = vmatprep.mubr.f32.mxu0 0.0
  %442 = vmatmul.mubr.f32.gmra.mrb[0].mxu0 %v375
  %v443 = vpop.f32.mrb[0].mxu0
  %v444 = vadd.f32 %v369, %v443
  %v445 = vpop.f32.mrb[0].mxu0
  %446 = vdwg.mxu0
  %v447 = vadd.f32 %v444, %v201
  %v448 = vxor.u32 %v447, 2147483648
  %v449 = vmul.f32 %v448, 1.442695
  %v450 = vpow.pop %v449
  %v451 = vadd.f32 %v450, 1.0
  %v452 = vrcp.pop %v451
  %v453 = vmul.f32 1.0, %v452
  %v454 = vtanh.pop %v447
  %v455 = vmul.f32 %v453, 0.0
  %457 = vrot.lane.b32.xlu0 %v454, 64
  %v458 = vpop.permute.xlu0 %457
  %v460 = vmul.f32 %v453, %v458
  %462 = vrot.lane.b32.xlu0 %v460, 32
  %v463 = vpop.permute.xlu0 %462
  %v465 = vadd.f32 %v455, %v463
  %v466 = vtanh.pop %v465
  %468 = vrot.lane.b32.xlu0 %v466, 64
  %v469 = vpop.permute.xlu0 %468
  %v471 = vmul.f32 %v453, %v469
  %472 = vmatprep.subr.mxu0 0.0
  %473 = vmatpush1.msra.mxu0 %v35
  %474 = vmatprep.subr.mxu0 0.0
  %475 = vmatpush1.msra.mxu0 %v36
  %476 = vmatprep.subr.mxu0 0.0
  %477 = vmatpush1.msra.mxu0 %v37
  %478 = vmatprep.subr.mxu0 0.0
  %479 = vmatpush1.msra.mxu0 %v38
  %480 = vmatprep.subr.mxu0 0.0
  %481 = vmatpush1.msra.mxu0 0.0
  %482 = vmatprep.subr.mxu0 0.0
  %483 = vmatpush1.msra.mxu0 0.0
  %484 = vmatprep.subr.mxu0 0.0
  %485 = vmatpush1.msra.mxu0 0.0
  %486 = vmatprep.subr.mxu0 0.0
  %487 = vmatpush1.msra.mxu0 0.0
  %488 = vmatprep.subr.mxu0 0.0
  %489 = vmatpush1.msra.mxu0 0.0
  %490 = vmatprep.subr.mxu0 0.0
  %491 = vmatpush1.msra.mxu0 0.0
  %492 = vmatprep.subr.mxu0 0.0
  %493 = vmatpush1.msra.mxu0 0.0
  %494 = vmatprep.subr.mxu0 0.0
  %495 = vmatpush1.msra.mxu0 0.0
  %496 = vmatprep.subr.mxu0 0.0
  %497 = vmatpush1.msra.mxu0 0.0
  %498 = vmatprep.subr.mxu0 0.0
  %499 = vmatpush1.msra.mxu0 0.0
  %500 = vmatprep.subr.mxu0 0.0
  %501 = vmatpush1.msra.mxu0 0.0
  %502 = vmatprep.subr.mxu0 0.0
  %503 = vmatpush1.msra.mxu0 0.0
  %504 = vmatprep.subr.mxu0 0.0
  %505 = vmatpush1.msra.mxu0 0.0
  %506 = vmatprep.subr.mxu0 0.0
  %507 = vmatpush1.msra.mxu0 0.0
  %508 = vmatprep.subr.mxu0 0.0
  %509 = vmatpush1.msra.mxu0 0.0
  %510 = vmatprep.subr.mxu0 0.0
  %511 = vmatpush1.msra.mxu0 0.0
  %512 = vmatprep.subr.mxu0 0.0
  %513 = vmatpush1.msra.mxu0 0.0
  %514 = vmatprep.subr.mxu0 0.0
  %515 = vmatpush1.msra.mxu0 0.0
  %516 = vmatprep.subr.mxu0 0.0
  %517 = vmatpush1.msra.mxu0 0.0
  %518 = vmatprep.subr.mxu0 0.0
  %519 = vmatpush1.msra.mxu0 0.0
  %520 = vmatprep.subr.mxu0 0.0
  %521 = vmatpush1.msra.mxu0 0.0
  %522 = vmatprep.subr.mxu0 0.0
  %523 = vmatpush1.msra.mxu0 0.0
  %524 = vmatprep.subr.mxu0 0.0
  %525 = vmatpush1.msra.mxu0 0.0
  %526 = vmatprep.subr.mxu0 0.0
  %527 = vmatpush1.msra.mxu0 0.0
  %528 = vmatprep.subr.mxu0 0.0
  %529 = vmatpush1.msra.mxu0 0.0
  %530 = vmatprep.subr.mxu0 0.0
  %531 = vmatpush1.msra.mxu0 0.0
  %532 = vmatprep.subr.mxu0 0.0
  %533 = vmatpush1.msra.mxu0 0.0
  %534 = vmatprep.subr.mxu0 0.0
  %535 = vmatpush1.msra.mxu0 0.0
  %536 = vmatprep.mubr.f32.mxu0 0.0
  %537 = vmatmul.mubr.f32.gmra.mrb[0].mxu0 %v375
  %v538 = vpop.f32.mrb[0].mxu0
  %v539 = vadd.f32 0.0, %v538
  %v540 = vpop.f32.mrb[0].mxu0
  %541 = vdwg.mxu0
  %v542 = vadd.f32 %v163, %v539
  %v543 = vxor.u32 %v542, 2147483648
  %v544 = vmul.f32 %v543, 1.442695
  %v545 = vpow.pop %v544
  %v546 = vadd.f32 %v545, 1.0
  %v547 = vrcp.pop %v546
  %v548 = vmul.f32 1.0, %v547
  %v549 = vtanh.pop %v542
  %v550 = vmul.f32 %v548, %v295
  %552 = vrot.lane.b32.xlu0 %v549, 64
  %v553 = vpop.permute.xlu0 %552
  %v555 = vmul.f32 %v548, %v553
  %557 = vrot.lane.b32.xlu0 %v555, 32
  %v558 = vpop.permute.xlu0 %557
  %v560 = vadd.f32 %v550, %v558
  %v561 = vtanh.pop %v560
  %563 = vrot.lane.b32.xlu0 %v561, 64
  %v564 = vpop.permute.xlu0 %563
  %v566 = vmul.f32 %v548, %v564
  %568 = vrot.lane.b32.xlu0 %v471, 32
  %v569 = vpop.permute.xlu0 %568
  %v570 = vsel %vm203, %v569, 0
  %572 = vmatprep.subr.mxu0 0.0
  %573 = vmatpush1.msra.mxu0 %v44
  %574 = vmatprep.subr.mxu0 0.0
  %575 = vmatpush1.msra.mxu0 %v45
  %576 = vmatprep.subr.mxu0 0.0
  %577 = vmatpush1.msra.mxu0 %v46
  %578 = vmatprep.subr.mxu0 0.0
  %579 = vmatpush1.msra.mxu0 %v47
  %580 = vmatprep.subr.mxu0 0.0
  %581 = vmatpush1.msra.mxu0 0.0
  %582 = vmatprep.subr.mxu0 0.0
  %583 = vmatpush1.msra.mxu0 0.0
  %584 = vmatprep.subr.mxu0 0.0
  %585 = vmatpush1.msra.mxu0 0.0
  %586 = vmatprep.subr.mxu0 0.0
  %587 = vmatpush1.msra.mxu0 0.0
  %588 = vmatprep.subr.mxu0 0.0
  %589 = vmatpush1.msra.mxu0 0.0
  %590 = vmatprep.subr.mxu0 0.0
  %591 = vmatpush1.msra.mxu0 0.0
  %592 = vmatprep.subr.mxu0 0.0
  %593 = vmatpush1.msra.mxu0 0.0
  %594 = vmatprep.subr.mxu0 0.0
  %595 = vmatpush1.msra.mxu0 0.0
  %596 = vmatprep.subr.mxu0 0.0
  %597 = vmatpush1.msra.mxu0 0.0
  %598 = vmatprep.subr.mxu0 0.0
  %599 = vmatpush1.msra.mxu0 0.0
  %600 = vmatprep.subr.mxu0 0.0
  %601 = vmatpush1.msra.mxu0 0.0
  %602 = vmatprep.subr.mxu0 0.0
  %603 = vmatpush1.msra.mxu0 0.0
  %604 = vmatprep.subr.mxu0 0.0
  %605 = vmatpush1.msra.mxu0 0.0
  %606 = vmatprep.subr.mxu0 0.0
  %607 = vmatpush1.msra.mxu0 0.0
  %608 = vmatprep.subr.mxu0 0.0
  %609 = vmatpush1.msra.mxu0 0.0
  %610 = vmatprep.subr.mxu0 0.0
  %611 = vmatpush1.msra.mxu0 0.0
  %612 = vmatprep.subr.mxu0 0.0
  %613 = vmatpush1.msra.mxu0 0.0
  %614 = vmatprep.subr.mxu0 0.0
  %615 = vmatpush1.msra.mxu0 0.0
  %616 = vmatprep.subr.mxu0 0.0
  %617 = vmatpush1.msra.mxu0 0.0
  %618 = vmatprep.subr.mxu0 0.0
  %619 = vmatpush1.msra.mxu0 0.0
  %620 = vmatprep.subr.mxu0 0.0
  %621 = vmatpush1.msra.mxu0 0.0
  %622 = vmatprep.subr.mxu0 0.0
  %623 = vmatpush1.msra.mxu0 0.0
  %624 = vmatprep.subr.mxu0 0.0
  %625 = vmatpush1.msra.mxu0 0.0
  %626 = vmatprep.subr.mxu0 0.0
  %627 = vmatpush1.msra.mxu0 0.0
  %628 = vmatprep.subr.mxu0 0.0
  %629 = vmatpush1.msra.mxu0 0.0
  %630 = vmatprep.subr.mxu0 0.0
  %631 = vmatpush1.msra.mxu0 0.0
  %632 = vmatprep.subr.mxu0 0.0
  %633 = vmatpush1.msra.mxu0 0.0
  %634 = vmatprep.subr.mxu0 0.0
  %635 = vmatpush1.msra.mxu0 0.0
  %636 = vmatprep.mubr.f32.mxu0 0.0
  %637 = vmatmul.mubr.f32.gmra.mrb[0].mxu0 %v570
  %v638 = vpop.f32.mrb[0].mxu0
  %v639 = vadd.f32 0.0, %v638
  %v640 = vpop.f32.mrb[0].mxu0
  %641 = vdwg.mxu0
  %643 = vrot.lane.b32.xlu0 %v566, 32
  %v644 = vpop.permute.xlu0 %643
  %v645 = vsel %vm203, %v644, 0
  %647 = vmatprep.subr.mxu0 0.0
  %648 = vmatpush1.msra.mxu0 %v40
  %649 = vmatprep.subr.mxu0 0.0
  %650 = vmatpush1.msra.mxu0 %v41
  %651 = vmatprep.subr.mxu0 0.0
  %652 = vmatpush1.msra.mxu0 %v42
  %653 = vmatprep.subr.mxu0 0.0
  %654 = vmatpush1.msra.mxu0 %v43
  %655 = vmatprep.subr.mxu0 0.0
  %656 = vmatpush1.msra.mxu0 0.0
  %657 = vmatprep.subr.mxu0 0.0
  %658 = vmatpush1.msra.mxu0 0.0
  %659 = vmatprep.subr.mxu0 0.0
  %660 = vmatpush1.msra.mxu0 0.0
  %661 = vmatprep.subr.mxu0 0.0
  %662 = vmatpush1.msra.mxu0 0.0
  %663 = vmatprep.subr.mxu0 0.0
  %664 = vmatpush1.msra.mxu0 0.0
  %665 = vmatprep.subr.mxu0 0.0
  %666 = vmatpush1.msra.mxu0 0.0
  %667 = vmatprep.subr.mxu0 0.0
  %668 = vmatpush1.msra.mxu0 0.0
  %669 = vmatprep.subr.mxu0 0.0
  %670 = vmatpush1.msra.mxu0 0.0
  %671 = vmatprep.subr.mxu0 0.0
  %672 = vmatpush1.msra.mxu0 0.0
  %673 = vmatprep.subr.mxu0 0.0
  %674 = vmatpush1.msra.mxu0 0.0
  %675 = vmatprep.subr.mxu0 0.0
  %676 = vmatpush1.msra.mxu0 0.0
  %677 = vmatprep.subr.mxu0 0.0
  %678 = vmatpush1.msra.mxu0 0.0
  %679 = vmatprep.subr.mxu0 0.0
  %680 = vmatpush1.msra.mxu0 0.0
  %681 = vmatprep.subr.mxu0 0.0
  %682 = vmatpush1.msra.mxu0 0.0
  %683 = vmatprep.subr.mxu0 0.0
  %684 = vmatpush1.msra.mxu0 0.0
  %685 = vmatprep.subr.mxu0 0.0
  %686 = vmatpush1.msra.mxu0 0.0
  %687 = vmatprep.subr.mxu0 0.0
  %688 = vmatpush1.msra.mxu0 0.0
  %689 = vmatprep.subr.mxu0 0.0
  %690 = vmatpush1.msra.mxu0 0.0
  %691 = vmatprep.subr.mxu0 0.0
  %692 = vmatpush1.msra.mxu0 0.0
  %693 = vmatprep.subr.mxu0 0.0
  %694 = vmatpush1.msra.mxu0 0.0
  %695 = vmatprep.subr.mxu0 0.0
  %696 = vmatpush1.msra.mxu0 0.0
  %697 = vmatprep.subr.mxu0 0.0
  %698 = vmatpush1.msra.mxu0 0.0
  %699 = vmatprep.subr.mxu0 0.0
  %700 = vmatpush1.msra.mxu0 0.0
  %701 = vmatprep.subr.mxu0 0.0
  %702 = vmatpush1.msra.mxu0 0.0
  %703 = vmatprep.subr.mxu0 0.0
  %704 = vmatpush1.msra.mxu0 0.0
  %705 = vmatprep.subr.mxu0 0.0
  %706 = vmatpush1.msra.mxu0 0.0
  %707 = vmatprep.subr.mxu0 0.0
  %708 = vmatpush1.msra.mxu0 0.0
  %709 = vmatprep.subr.mxu0 0.0
  %710 = vmatpush1.msra.mxu0 0.0
  %711 = vmatprep.mubr.f32.mxu0 0.0
  %712 = vmatmul.mubr.f32.gmra.mrb[0].mxu0 %v645
  %v713 = vpop.f32.mrb[0].mxu0
  %v714 = vadd.f32 %v639, %v713
  %v715 = vpop.f32.mrb[0].mxu0
  %716 = vdwg.mxu0
  %v717 = vadd.f32 %v714, %v201
  %v718 = vxor.u32 %v717, 2147483648
  %v719 = vmul.f32 %v718, 1.442695
  %v720 = vpow.pop %v719
  %v721 = vadd.f32 %v720, 1.0
  %v722 = vrcp.pop %v721
  %v723 = vmul.f32 1.0, %v722
  %v724 = vtanh.pop %v717
  %v725 = vmul.f32 %v723, %v465
  %727 = vrot.lane.b32.xlu0 %v724, 64
  %v728 = vpop.permute.xlu0 %727
  %v730 = vmul.f32 %v723, %v728
  %732 = vrot.lane.b32.xlu0 %v730, 32
  %v733 = vpop.permute.xlu0 %732
  %v735 = vadd.f32 %v725, %v733
  %v736 = vtanh.pop %v735
  %738 = vrot.lane.b32.xlu0 %v736, 64
  %v739 = vpop.permute.xlu0 %738
  %v741 = vmul.f32 %v723, %v739
  %742 = vmatprep.subr.mxu0 0.0
  %743 = vmatpush1.msra.mxu0 %v35
  %744 = vmatprep.subr.mxu0 0.0
  %745 = vmatpush1.msra.mxu0 %v36
  %746 = vmatprep.subr.mxu0 0.0
  %747 = vmatpush1.msra.mxu0 %v37
  %748 = vmatprep.subr.mxu0 0.0
  %749 = vmatpush1.msra.mxu0 %v38
  %750 = vmatprep.subr.mxu0 0.0
  %751 = vmatpush1.msra.mxu0 0.0
  %752 = vmatprep.subr.mxu0 0.0
  %753 = vmatpush1.msra.mxu0 0.0
  %754 = vmatprep.subr.mxu0 0.0
  %755 = vmatpush1.msra.mxu0 0.0
  %756 = vmatprep.subr.mxu0 0.0
  %757 = vmatpush1.msra.mxu0 0.0
  %758 = vmatprep.subr.mxu0 0.0
  %759 = vmatpush1.msra.mxu0 0.0
  %760 = vmatprep.subr.mxu0 0.0
  %761 = vmatpush1.msra.mxu0 0.0
  %762 = vmatprep.subr.mxu0 0.0
  %763 = vmatpush1.msra.mxu0 0.0
  %764 = vmatprep.subr.mxu0 0.0
  %765 = vmatpush1.msra.mxu0 0.0
  %766 = vmatprep.subr.mxu0 0.0
  %767 = vmatpush1.msra.mxu0 0.0
  %768 = vmatprep.subr.mxu0 0.0
  %769 = vmatpush1.msra.mxu0 0.0
  %770 = vmatprep.subr.mxu0 0.0
  %771 = vmatpush1.msra.mxu0 0.0
  %772 = vmatprep.subr.mxu0 0.0
  %773 = vmatpush1.msra.mxu0 0.0
  %774 = vmatprep.subr.mxu0 0.0
  %775 = vmatpush1.msra.mxu0 0.0
  %776 = vmatprep.subr.mxu0 0.0
  %777 = vmatpush1.msra.mxu0 0.0
  %778 = vmatprep.subr.mxu0 0.0
  %779 = vmatpush1.msra.mxu0 0.0
  %780 = vmatprep.subr.mxu0 0.0
  %781 = vmatpush1.msra.mxu0 0.0
  %782 = vmatprep.subr.mxu0 0.0
  %783 = vmatpush1.msra.mxu0 0.0
  %784 = vmatprep.subr.mxu0 0.0
  %785 = vmatpush1.msra.mxu0 0.0
  %786 = vmatprep.subr.mxu0 0.0
  %787 = vmatpush1.msra.mxu0 0.0
  %788 = vmatprep.subr.mxu0 0.0
  %789 = vmatpush1.msra.mxu0 0.0
  %790 = vmatprep.subr.mxu0 0.0
  %791 = vmatpush1.msra.mxu0 0.0
  %792 = vmatprep.subr.mxu0 0.0
  %793 = vmatpush1.msra.mxu0 0.0
  %794 = vmatprep.subr.mxu0 0.0
  %795 = vmatpush1.msra.mxu0 0.0
  %796 = vmatprep.subr.mxu0 0.0
  %797 = vmatpush1.msra.mxu0 0.0
  %798 = vmatprep.subr.mxu0 0.0
  %799 = vmatpush1.msra.mxu0 0.0
  %800 = vmatprep.subr.mxu0 0.0
  %801 = vmatpush1.msra.mxu0 0.0
  %802 = vmatprep.subr.mxu0 0.0
  %803 = vmatpush1.msra.mxu0 0.0
  %804 = vmatprep.subr.mxu0 0.0
  %805 = vmatpush1.msra.mxu0 0.0
  %806 = vmatprep.mubr.f32.mxu0 0.0
  %807 = vmatmul.mubr.f32.gmra.mrb[0].mxu0 %v645
  %v808 = vpop.f32.mrb[0].mxu0
  %v809 = vadd.f32 0.0, %v808
  %v810 = vpop.f32.mrb[0].mxu0
  %811 = vdwg.mxu0
  %v812 = vadd.f32 %v168, %v809
  %v813 = vxor.u32 %v812, 2147483648
  %v814 = vmul.f32 %v813, 1.442695
  %v815 = vpow.pop %v814
  %v816 = vadd.f32 %v815, 1.0
  %v817 = vrcp.pop %v816
  %v818 = vmul.f32 1.0, %v817
  %v819 = vtanh.pop %v812
  %v820 = vmul.f32 %v818, %v560
  %822 = vrot.lane.b32.xlu0 %v819, 64
  %v823 = vpop.permute.xlu0 %822
  %v825 = vmul.f32 %v818, %v823
  %827 = vrot.lane.b32.xlu0 %v825, 32
  %v828 = vpop.permute.xlu0 %827
  %v830 = vadd.f32 %v820, %v828
  %v831 = vtanh.pop %v830
  %833 = vrot.lane.b32.xlu0 %v831, 64
  %v834 = vpop.permute.xlu0 %833
  %v836 = vmul.f32 %v818, %v834
  %838 = vrot.lane.b32.xlu0 %v741, 32
  %v839 = vpop.permute.xlu0 %838
  %v840 = vsel %vm203, %v839, 0
  %842 = vmatprep.subr.mxu0 0.0
  %843 = vmatpush1.msra.mxu0 %v44
  %844 = vmatprep.subr.mxu0 0.0
  %845 = vmatpush1.msra.mxu0 %v45
  %846 = vmatprep.subr.mxu0 0.0
  %847 = vmatpush1.msra.mxu0 %v46
  %848 = vmatprep.subr.mxu0 0.0
  %849 = vmatpush1.msra.mxu0 %v47
  %850 = vmatprep.subr.mxu0 0.0
  %851 = vmatpush1.msra.mxu0 0.0
  %852 = vmatprep.subr.mxu0 0.0
  %853 = vmatpush1.msra.mxu0 0.0
  %854 = vmatprep.subr.mxu0 0.0
  %855 = vmatpush1.msra.mxu0 0.0
  %856 = vmatprep.subr.mxu0 0.0
  %857 = vmatpush1.msra.mxu0 0.0
  %858 = vmatprep.subr.mxu0 0.0
  %859 = vmatpush1.msra.mxu0 0.0
  %860 = vmatprep.subr.mxu0 0.0
  %861 = vmatpush1.msra.mxu0 0.0
  %862 = vmatprep.subr.mxu0 0.0
  %863 = vmatpush1.msra.mxu0 0.0
  %864 = vmatprep.subr.mxu0 0.0
  %865 = vmatpush1.msra.mxu0 0.0
  %866 = vmatprep.subr.mxu0 0.0
  %867 = vmatpush1.msra.mxu0 0.0
  %868 = vmatprep.subr.mxu0 0.0
  %869 = vmatpush1.msra.mxu0 0.0
  %870 = vmatprep.subr.mxu0 0.0
  %871 = vmatpush1.msra.mxu0 0.0
  %872 = vmatprep.subr.mxu0 0.0
  %873 = vmatpush1.msra.mxu0 0.0
  %874 = vmatprep.subr.mxu0 0.0
  %875 = vmatpush1.msra.mxu0 0.0
  %876 = vmatprep.subr.mxu0 0.0
  %877 = vmatpush1.msra.mxu0 0.0
  %878 = vmatprep.subr.mxu0 0.0
  %879 = vmatpush1.msra.mxu0 0.0
  %880 = vmatprep.subr.mxu0 0.0
  %881 = vmatpush1.msra.mxu0 0.0
  %882 = vmatprep.subr.mxu0 0.0
  %883 = vmatpush1.msra.mxu0 0.0
  %884 = vmatprep.subr.mxu0 0.0
  %885 = vmatpush1.msra.mxu0 0.0
  %886 = vmatprep.subr.mxu0 0.0
  %887 = vmatpush1.msra.mxu0 0.0
  %888 = vmatprep.subr.mxu0 0.0
  %889 = vmatpush1.msra.mxu0 0.0
  %890 = vmatprep.subr.mxu0 0.0
  %891 = vmatpush1.msra.mxu0 0.0
  %892 = vmatprep.subr.mxu0 0.0
  %893 = vmatpush1.msra.mxu0 0.0
  %894 = vmatprep.subr.mxu0 0.0
  %895 = vmatpush1.msra.mxu0 0.0
  %896 = vmatprep.subr.mxu0 0.0
  %897 = vmatpush1.msra.mxu0 0.0
  %898 = vmatprep.subr.mxu0 0.0
  %899 = vmatpush1.msra.mxu0 0.0
  %900 = vmatprep.subr.mxu0 0.0
  %901 = vmatpush1.msra.mxu0 0.0
  %902 = vmatprep.subr.mxu0 0.0
  %903 = vmatpush1.msra.mxu0 0.0
  %904 = vmatprep.subr.mxu0 0.0
  %905 = vmatpush1.msra.mxu0 0.0
  %906 = vmatprep.mubr.f32.mxu0 0.0
  %907 = vmatmul.mubr.f32.gmra.mrb[0].mxu0 %v840
  %v908 = vpop.f32.mrb[0].mxu0
  %v909 = vadd.f32 0.0, %v908
  %v910 = vpop.f32.mrb[0].mxu0
  %911 = vdwg.mxu0
  %913 = vrot.lane.b32.xlu0 %v836, 32
  %v914 = vpop.permute.xlu0 %913
  %v915 = vsel %vm203, %v914, 0
  %917 = vmatprep.subr.mxu0 0.0
  %918 = vmatpush1.msra.mxu0 %v40
  %919 = vmatprep.subr.mxu0 0.0
  %920 = vmatpush1.msra.mxu0 %v41
  %921 = vmatprep.subr.mxu0 0.0
  %922 = vmatpush1.msra.mxu0 %v42
  %923 = vmatprep.subr.mxu0 0.0
  %924 = vmatpush1.msra.mxu0 %v43
  %925 = vmatprep.subr.mxu0 0.0
  %926 = vmatpush1.msra.mxu0 0.0
  %927 = vmatprep.subr.mxu0 0.0
  %928 = vmatpush1.msra.mxu0 0.0
  %929 = vmatprep.subr.mxu0 0.0
  %930 = vmatpush1.msra.mxu0 0.0
  %931 = vmatprep.subr.mxu0 0.0
  %932 = vmatpush1.msra.mxu0 0.0
  %933 = vmatprep.subr.mxu0 0.0
  %934 = vmatpush1.msra.mxu0 0.0
  %935 = vmatprep.subr.mxu0 0.0
  %936 = vmatpush1.msra.mxu0 0.0
  %937 = vmatprep.subr.mxu0 0.0
  %938 = vmatpush1.msra.mxu0 0.0
  %939 = vmatprep.subr.mxu0 0.0
  %940 = vmatpush1.msra.mxu0 0.0
  %941 = vmatprep.subr.mxu0 0.0
  %942 = vmatpush1.msra.mxu0 0.0
  %943 = vmatprep.subr.mxu0 0.0
  %944 = vmatpush1.msra.mxu0 0.0
  %945 = vmatprep.subr.mxu0 0.0
  %946 = vmatpush1.msra.mxu0 0.0
  %947 = vmatprep.subr.mxu0 0.0
  %948 = vmatpush1.msra.mxu0 0.0
  %949 = vmatprep.subr.mxu0 0.0
  %950 = vmatpush1.msra.mxu0 0.0
  %951 = vmatprep.subr.mxu0 0.0
  %952 = vmatpush1.msra.mxu0 0.0
  %953 = vmatprep.subr.mxu0 0.0
  %954 = vmatpush1.msra.mxu0 0.0
  %955 = vmatprep.subr.mxu0 0.0
  %956 = vmatpush1.msra.mxu0 0.0
  %957 = vmatprep.subr.mxu0 0.0
  %958 = vmatpush1.msra.mxu0 0.0
  %959 = vmatprep.subr.mxu0 0.0
  %960 = vmatpush1.msra.mxu0 0.0
  %961 = vmatprep.subr.mxu0 0.0
  %962 = vmatpush1.msra.mxu0 0.0
  %963 = vmatprep.subr.mxu0 0.0
  %964 = vmatpush1.msra.mxu0 0.0
  %965 = vmatprep.subr.mxu0 0.0
  %966 = vmatpush1.msra.mxu0 0.0
  %967 = vmatprep.subr.mxu0 0.0
  %968 = vmatpush1.msra.mxu0 0.0
  %969 = vmatprep.subr.mxu0 0.0
  %970 = vmatpush1.msra.mxu0 0.0
  %971 = vmatprep.subr.mxu0 0.0
  %972 = vmatpush1.msra.mxu0 0.0
  %973 = vmatprep.subr.mxu0 0.0
  %974 = vmatpush1.msra.mxu0 0.0
  %975 = vmatprep.subr.mxu0 0.0
  %976 = vmatpush1.msra.mxu0 0.0
  %977 = vmatprep.subr.mxu0 0.0
  %978 = vmatpush1.msra.mxu0 0.0
  %979 = vmatprep.subr.mxu0 0.0
  %980 = vmatpush1.msra.mxu0 0.0
  %981 = vmatprep.mubr.f32.mxu0 0.0
  %982 = vmatmul.mubr.f32.gmra.mrb[0].mxu0 %v915
  %v983 = vpop.f32.mrb[0].mxu0
  %v984 = vadd.f32 %v909, %v983
  %v985 = vpop.f32.mrb[0].mxu0
  %986 = vdwg.mxu0
  %v987 = vadd.f32 %v984, %v201
  %v988 = vxor.u32 %v987, 2147483648
  %v989 = vmul.f32 %v988, 1.442695
  %v990 = vpow.pop %v989
  %v991 = vadd.f32 %v990, 1.0
  %v992 = vrcp.pop %v991
  %v993 = vmul.f32 1.0, %v992
  %v994 = vtanh.pop %v987
  %v995 = vmul.f32 %v993, %v735
  %997 = vrot.lane.b32.xlu0 %v994, 64
  %v998 = vpop.permute.xlu0 %997
  %v1000 = vmul.f32 %v993, %v998
  %1002 = vrot.lane.b32.xlu0 %v1000, 32
  %v1003 = vpop.permute.xlu0 %1002
  %v1005 = vadd.f32 %v995, %v1003
  %v1006 = vtanh.pop %v1005
  %1008 = vrot.lane.b32.xlu0 %v1006, 64
  %v1009 = vpop.permute.xlu0 %1008
  %v1011 = vmul.f32 %v993, %v1009
  %1012 = vmatprep.subr.mxu0 0.0
  %1013 = vmatpush1.msra.mxu0 %v35
  %1014 = vmatprep.subr.mxu0 0.0
  %1015 = vmatpush1.msra.mxu0 %v36
  %1016 = vmatprep.subr.mxu0 0.0
  %1017 = vmatpush1.msra.mxu0 %v37
  %1018 = vmatprep.subr.mxu0 0.0
  %1019 = vmatpush1.msra.mxu0 %v38
  %1020 = vmatprep.subr.mxu0 0.0
  %1021 = vmatpush1.msra.mxu0 0.0
  %1022 = vmatprep.subr.mxu0 0.0
  %1023 = vmatpush1.msra.mxu0 0.0
  %1024 = vmatprep.subr.mxu0 0.0
  %1025 = vmatpush1.msra.mxu0 0.0
  %1026 = vmatprep.subr.mxu0 0.0
  %1027 = vmatpush1.msra.mxu0 0.0
  %1028 = vmatprep.subr.mxu0 0.0
  %1029 = vmatpush1.msra.mxu0 0.0
  %1030 = vmatprep.subr.mxu0 0.0
  %1031 = vmatpush1.msra.mxu0 0.0
  %1032 = vmatprep.subr.mxu0 0.0
  %1033 = vmatpush1.msra.mxu0 0.0
  %1034 = vmatprep.subr.mxu0 0.0
  %1035 = vmatpush1.msra.mxu0 0.0
  %1036 = vmatprep.subr.mxu0 0.0
  %1037 = vmatpush1.msra.mxu0 0.0
  %1038 = vmatprep.subr.mxu0 0.0
  %1039 = vmatpush1.msra.mxu0 0.0
  %1040 = vmatprep.subr.mxu0 0.0
  %1041 = vmatpush1.msra.mxu0 0.0
  %1042 = vmatprep.subr.mxu0 0.0
  %1043 = vmatpush1.msra.mxu0 0.0
  %1044 = vmatprep.subr.mxu0 0.0
  %1045 = vmatpush1.msra.mxu0 0.0
  %1046 = vmatprep.subr.mxu0 0.0
  %1047 = vmatpush1.msra.mxu0 0.0
  %1048 = vmatprep.subr.mxu0 0.0
  %1049 = vmatpush1.msra.mxu0 0.0
  %1050 = vmatprep.subr.mxu0 0.0
  %1051 = vmatpush1.msra.mxu0 0.0
  %1052 = vmatprep.subr.mxu0 0.0
  %1053 = vmatpush1.msra.mxu0 0.0
  %1054 = vmatprep.subr.mxu0 0.0
  %1055 = vmatpush1.msra.mxu0 0.0
  %1056 = vmatprep.subr.mxu0 0.0
  %1057 = vmatpush1.msra.mxu0 0.0
  %1058 = vmatprep.subr.mxu0 0.0
  %1059 = vmatpush1.msra.mxu0 0.0
  %1060 = vmatprep.subr.mxu0 0.0
  %1061 = vmatpush1.msra.mxu0 0.0
  %1062 = vmatprep.subr.mxu0 0.0
  %1063 = vmatpush1.msra.mxu0 0.0
  %1064 = vmatprep.subr.mxu0 0.0
  %1065 = vmatpush1.msra.mxu0 0.0
  %1066 = vmatprep.subr.mxu0 0.0
  %1067 = vmatpush1.msra.mxu0 0.0
  %1068 = vmatprep.subr.mxu0 0.0
  %1069 = vmatpush1.msra.mxu0 0.0
  %1070 = vmatprep.subr.mxu0 0.0
  %1071 = vmatpush1.msra.mxu0 0.0
  %1072 = vmatprep.subr.mxu0 0.0
  %1073 = vmatpush1.msra.mxu0 0.0
  %1074 = vmatprep.subr.mxu0 0.0
  %1075 = vmatpush1.msra.mxu0 0.0
  %1076 = vmatprep.mubr.f32.mxu0 0.0
  %1077 = vmatmul.mubr.f32.gmra.mrb[0].mxu0 %v915
  %v1078 = vpop.f32.mrb[0].mxu0
  %v1079 = vadd.f32 0.0, %v1078
  %v1080 = vpop.f32.mrb[0].mxu0
  %1081 = vdwg.mxu0
  %v1082 = vadd.f32 %v173, %v1079
  %v1083 = vxor.u32 %v1082, 2147483648
  %v1084 = vmul.f32 %v1083, 1.442695
  %v1085 = vpow.pop %v1084
  %v1086 = vadd.f32 %v1085, 1.0
  %v1087 = vrcp.pop %v1086
  %v1088 = vmul.f32 1.0, %v1087
  %v1089 = vtanh.pop %v1082
  %v1090 = vmul.f32 %v1088, %v830
  %1092 = vrot.lane.b32.xlu0 %v1089, 64
  %v1093 = vpop.permute.xlu0 %1092
  %v1095 = vmul.f32 %v1088, %v1093
  %1097 = vrot.lane.b32.xlu0 %v1095, 32
  %v1098 = vpop.permute.xlu0 %1097
  %v1100 = vadd.f32 %v1090, %v1098
  %v1101 = vtanh.pop %v1100
  %1103 = vrot.lane.b32.xlu0 %v1101, 64
  %v1104 = vpop.permute.xlu0 %1103
  %v1106 = vmul.f32 %v1088, %v1104
  %1108 = vrot.lane.b32.xlu0 %v1011, 32
  %v1109 = vpop.permute.xlu0 %1108
  %v1110 = vsel %vm203, %v1109, 0
  %1112 = vmatprep.subr.mxu0 0.0
  %1113 = vmatpush1.msra.mxu0 %v44
  %1114 = vmatprep.subr.mxu0 0.0
  %1115 = vmatpush1.msra.mxu0 %v45
  %1116 = vmatprep.subr.mxu0 0.0
  %1117 = vmatpush1.msra.mxu0 %v46
  %1118 = vmatprep.subr.mxu0 0.0
  %1119 = vmatpush1.msra.mxu0 %v47
  %1120 = vmatprep.subr.mxu0 0.0
  %1121 = vmatpush1.msra.mxu0 0.0
  %1122 = vmatprep.subr.mxu0 0.0
  %1123 = vmatpush1.msra.mxu0 0.0
  %1124 = vmatprep.subr.mxu0 0.0
  %1125 = vmatpush1.msra.mxu0 0.0
  %1126 = vmatprep.subr.mxu0 0.0
  %1127 = vmatpush1.msra.mxu0 0.0
  %1128 = vmatprep.subr.mxu0 0.0
  %1129 = vmatpush1.msra.mxu0 0.0
  %1130 = vmatprep.subr.mxu0 0.0
  %1131 = vmatpush1.msra.mxu0 0.0
  %1132 = vmatprep.subr.mxu0 0.0
  %1133 = vmatpush1.msra.mxu0 0.0
  %1134 = vmatprep.subr.mxu0 0.0
  %1135 = vmatpush1.msra.mxu0 0.0
  %1136 = vmatprep.subr.mxu0 0.0
  %1137 = vmatpush1.msra.mxu0 0.0
  %1138 = vmatprep.subr.mxu0 0.0
  %1139 = vmatpush1.msra.mxu0 0.0
  %1140 = vmatprep.subr.mxu0 0.0
  %1141 = vmatpush1.msra.mxu0 0.0
  %1142 = vmatprep.subr.mxu0 0.0
  %1143 = vmatpush1.msra.mxu0 0.0
  %1144 = vmatprep.subr.mxu0 0.0
  %1145 = vmatpush1.msra.mxu0 0.0
  %1146 = vmatprep.subr.mxu0 0.0
  %1147 = vmatpush1.msra.mxu0 0.0
  %1148 = vmatprep.subr.mxu0 0.0
  %1149 = vmatpush1.msra.mxu0 0.0
  %1150 = vmatprep.subr.mxu0 0.0
  %1151 = vmatpush1.msra.mxu0 0.0
  %1152 = vmatprep.subr.mxu0 0.0
  %1153 = vmatpush1.msra.mxu0 0.0
  %1154 = vmatprep.subr.mxu0 0.0
  %1155 = vmatpush1.msra.mxu0 0.0
  %1156 = vmatprep.subr.mxu0 0.0
  %1157 = vmatpush1.msra.mxu0 0.0
  %1158 = vmatprep.subr.mxu0 0.0
  %1159 = vmatpush1.msra.mxu0 0.0
  %1160 = vmatprep.subr.mxu0 0.0
  %1161 = vmatpush1.msra.mxu0 0.0
  %1162 = vmatprep.subr.mxu0 0.0
  %1163 = vmatpush1.msra.mxu0 0.0
  %1164 = vmatprep.subr.mxu0 0.0
  %1165 = vmatpush1.msra.mxu0 0.0
  %1166 = vmatprep.subr.mxu0 0.0
  %1167 = vmatpush1.msra.mxu0 0.0
  %1168 = vmatprep.subr.mxu0 0.0
  %1169 = vmatpush1.msra.mxu0 0.0
  %1170 = vmatprep.subr.mxu0 0.0
  %1171 = vmatpush1.msra.mxu0 0.0
  %1172 = vmatprep.subr.mxu0 0.0
  %1173 = vmatpush1.msra.mxu0 0.0
  %1174 = vmatprep.subr.mxu0 0.0
  %1175 = vmatpush1.msra.mxu0 0.0
  %1176 = vmatprep.mubr.f32.mxu0 0.0
  %1177 = vmatmul.mubr.f32.gmra.mrb[0].mxu0 %v1110
  %v1178 = vpop.f32.mrb[0].mxu0
  %v1179 = vadd.f32 0.0, %v1178
  %v1180 = vpop.f32.mrb[0].mxu0
  %1181 = vdwg.mxu0
  %1183 = vrot.lane.b32.xlu0 %v1106, 32
  %v1184 = vpop.permute.xlu0 %1183
  %v1185 = vsel %vm203, %v1184, 0
  %1187 = vmatprep.subr.mxu0 0.0
  %1188 = vmatpush1.msra.mxu0 %v40
  %1189 = vmatprep.subr.mxu0 0.0
  %1190 = vmatpush1.msra.mxu0 %v41
  %1191 = vmatprep.subr.mxu0 0.0
  %1192 = vmatpush1.msra.mxu0 %v42
  %1193 = vmatprep.subr.mxu0 0.0
  %1194 = vmatpush1.msra.mxu0 %v43
  %1195 = vmatprep.subr.mxu0 0.0
  %1196 = vmatpush1.msra.mxu0 0.0
  %1197 = vmatprep.subr.mxu0 0.0
  %1198 = vmatpush1.msra.mxu0 0.0
  %1199 = vmatprep.subr.mxu0 0.0
  %1200 = vmatpush1.msra.mxu0 0.0
  %1201 = vmatprep.subr.mxu0 0.0
  %1202 = vmatpush1.msra.mxu0 0.0
  %1203 = vmatprep.subr.mxu0 0.0
  %1204 = vmatpush1.msra.mxu0 0.0
  %1205 = vmatprep.subr.mxu0 0.0
  %1206 = vmatpush1.msra.mxu0 0.0
  %1207 = vmatprep.subr.mxu0 0.0
  %1208 = vmatpush1.msra.mxu0 0.0
  %1209 = vmatprep.subr.mxu0 0.0
  %1210 = vmatpush1.msra.mxu0 0.0
  %1211 = vmatprep.subr.mxu0 0.0
  %1212 = vmatpush1.msra.mxu0 0.0
  %1213 = vmatprep.subr.mxu0 0.0
  %1214 = vmatpush1.msra.mxu0 0.0
  %1215 = vmatprep.subr.mxu0 0.0
  %1216 = vmatpush1.msra.mxu0 0.0
  %1217 = vmatprep.subr.mxu0 0.0
  %1218 = vmatpush1.msra.mxu0 0.0
  %1219 = vmatprep.subr.mxu0 0.0
  %1220 = vmatpush1.msra.mxu0 0.0
  %1221 = vmatprep.subr.mxu0 0.0
  %1222 = vmatpush1.msra.mxu0 0.0
  %1223 = vmatprep.subr.mxu0 0.0
  %1224 = vmatpush1.msra.mxu0 0.0
  %1225 = vmatprep.subr.mxu0 0.0
  %1226 = vmatpush1.msra.mxu0 0.0
  %1227 = vmatprep.subr.mxu0 0.0
  %1228 = vmatpush1.msra.mxu0 0.0
  %1229 = vmatprep.subr.mxu0 0.0
  %1230 = vmatpush1.msra.mxu0 0.0
  %1231 = vmatprep.subr.mxu0 0.0
  %1232 = vmatpush1.msra.mxu0 0.0
  %1233 = vmatprep.subr.mxu0 0.0
  %1234 = vmatpush1.msra.mxu0 0.0
  %1235 = vmatprep.subr.mxu0 0.0
  %1236 = vmatpush1.msra.mxu0 0.0
  %1237 = vmatprep.subr.mxu0 0.0
  %1238 = vmatpush1.msra.mxu0 0.0
  %1239 = vmatprep.subr.mxu0 0.0
  %1240 = vmatpush1.msra.mxu0 0.0
  %1241 = vmatprep.subr.mxu0 0.0
  %1242 = vmatpush1.msra.mxu0 0.0
  %1243 = vmatprep.subr.mxu0 0.0
  %1244 = vmatpush1.msra.mxu0 0.0
  %1245 = vmatprep.subr.mxu0 0.0
  %1246 = vmatpush1.msra.mxu0 0.0
  %1247 = vmatprep.subr.mxu0 0.0
  %1248 = vmatpush1.msra.mxu0 0.0
  %1249 = vmatprep.subr.mxu0 0.0
  %1250 = vmatpush1.msra.mxu0 0.0
  %1251 = vmatprep.mubr.f32.mxu0 0.0
  %1252 = vmatmul.mubr.f32.gmra.mrb[0].mxu0 %v1185
  %v1253 = vpop.f32.mrb[0].mxu0
  %v1254 = vadd.f32 %v1179, %v1253
  %v1255 = vpop.f32.mrb[0].mxu0
  %1256 = vdwg.mxu0
  %v1257 = vadd.f32 %v1254, %v201
  %v1258 = vxor.u32 %v1257, 2147483648
  %v1259 = vmul.f32 %v1258, 1.442695
  %v1260 = vpow.pop %v1259
  %v1261 = vadd.f32 %v1260, 1.0
  %v1262 = vrcp.pop %v1261
  %v1263 = vmul.f32 1.0, %v1262
  %v1264 = vtanh.pop %v1257
  %v1265 = vmul.f32 %v1263, %v1005
  %1267 = vrot.lane.b32.xlu0 %v1264, 64
  %v1268 = vpop.permute.xlu0 %1267
  %v1270 = vmul.f32 %v1263, %v1268
  %1272 = vrot.lane.b32.xlu0 %v1270, 32
  %v1273 = vpop.permute.xlu0 %1272
  %v1275 = vadd.f32 %v1265, %v1273
  %v1276 = vtanh.pop %v1275
  %1278 = vrot.lane.b32.xlu0 %v1276, 64
  %v1279 = vpop.permute.xlu0 %1278
  %v1281 = vmul.f32 %v1263, %v1279
  %1282 = vmatprep.subr.mxu0 0.0
  %1283 = vmatpush1.msra.mxu0 %v35
  %1284 = vmatprep.subr.mxu0 0.0
  %1285 = vmatpush1.msra.mxu0 %v36
  %1286 = vmatprep.subr.mxu0 0.0
  %1287 = vmatpush1.msra.mxu0 %v37
  %1288 = vmatprep.subr.mxu0 0.0
  %1289 = vmatpush1.msra.mxu0 %v38
  %1290 = vmatprep.subr.mxu0 0.0
  %1291 = vmatpush1.msra.mxu0 0.0
  %1292 = vmatprep.subr.mxu0 0.0
  %1293 = vmatpush1.msra.mxu0 0.0
  %1294 = vmatprep.subr.mxu0 0.0
  %1295 = vmatpush1.msra.mxu0 0.0
  %1296 = vmatprep.subr.mxu0 0.0
  %1297 = vmatpush1.msra.mxu0 0.0
  %1298 = vmatprep.subr.mxu0 0.0
  %1299 = vmatpush1.msra.mxu0 0.0
  %1300 = vmatprep.subr.mxu0 0.0
  %1301 = vmatpush1.msra.mxu0 0.0
  %1302 = vmatprep.subr.mxu0 0.0
  %1303 = vmatpush1.msra.mxu0 0.0
  %1304 = vmatprep.subr.mxu0 0.0
  %1305 = vmatpush1.msra.mxu0 0.0
  %1306 = vmatprep.subr.mxu0 0.0
  %1307 = vmatpush1.msra.mxu0 0.0
  %1308 = vmatprep.subr.mxu0 0.0
  %1309 = vmatpush1.msra.mxu0 0.0
  %1310 = vmatprep.subr.mxu0 0.0
  %1311 = vmatpush1.msra.mxu0 0.0
  %1312 = vmatprep.subr.mxu0 0.0
  %1313 = vmatpush1.msra.mxu0 0.0
  %1314 = vmatprep.subr.mxu0 0.0
  %1315 = vmatpush1.msra.mxu0 0.0
  %1316 = vmatprep.subr.mxu0 0.0
  %1317 = vmatpush1.msra.mxu0 0.0
  %1318 = vmatprep.subr.mxu0 0.0
  %1319 = vmatpush1.msra.mxu0 0.0
  %1320 = vmatprep.subr.mxu0 0.0
  %1321 = vmatpush1.msra.mxu0 0.0
  %1322 = vmatprep.subr.mxu0 0.0
  %1323 = vmatpush1.msra.mxu0 0.0
  %1324 = vmatprep.subr.mxu0 0.0
  %1325 = vmatpush1.msra.mxu0 0.0
  %1326 = vmatprep.subr.mxu0 0.0
  %1327 = vmatpush1.msra.mxu0 0.0
  %1328 = vmatprep.subr.mxu0 0.0
  %1329 = vmatpush1.msra.mxu0 0.0
  %1330 = vmatprep.subr.mxu0 0.0
  %1331 = vmatpush1.msra.mxu0 0.0
  %1332 = vmatprep.subr.mxu0 0.0
  %1333 = vmatpush1.msra.mxu0 0.0
  %1334 = vmatprep.subr.mxu0 0.0
  %1335 = vmatpush1.msra.mxu0 0.0
  %1336 = vmatprep.subr.mxu0 0.0
  %1337 = vmatpush1.msra.mxu0 0.0
  %1338 = vmatprep.subr.mxu0 0.0
  %1339 = vmatpush1.msra.mxu0 0.0
  %1340 = vmatprep.subr.mxu0 0.0
  %1341 = vmatpush1.msra.mxu0 0.0
  %1342 = vmatprep.subr.mxu0 0.0
  %1343 = vmatpush1.msra.mxu0 0.0
  %1344 = vmatprep.subr.mxu0 0.0
  %1345 = vmatpush1.msra.mxu0 0.0
  %1346 = vmatprep.mubr.f32.mxu0 0.0
  %1347 = vmatmul.mubr.f32.gmra.mrb[0].mxu0 %v1185
  %v1348 = vpop.f32.mrb[0].mxu0
  %v1349 = vadd.f32 0.0, %v1348
  %v1350 = vpop.f32.mrb[0].mxu0
  %1351 = vdwg.mxu0
  %v1352 = vadd.f32 %v178, %v1349
  %v1353 = vxor.u32 %v1352, 2147483648
  %v1354 = vmul.f32 %v1353, 1.442695
  %v1355 = vpow.pop %v1354
  %v1356 = vadd.f32 %v1355, 1.0
  %v1357 = vrcp.pop %v1356
  %v1358 = vmul.f32 1.0, %v1357
  %v1359 = vtanh.pop %v1352
  %v1360 = vmul.f32 %v1358, %v1100
  %1362 = vrot.lane.b32.xlu0 %v1359, 64
  %v1363 = vpop.permute.xlu0 %1362
  %v1365 = vmul.f32 %v1358, %v1363
  %1367 = vrot.lane.b32.xlu0 %v1365, 32
  %v1368 = vpop.permute.xlu0 %1367
  %v1370 = vadd.f32 %v1360, %v1368
  %v1371 = vtanh.pop %v1370
  %1373 = vrot.lane.b32.xlu0 %v1371, 64
  %v1374 = vpop.permute.xlu0 %1373
  %v1376 = vmul.f32 %v1358, %v1374
  %1378 = vrot.lane.b32.xlu0 %v1281, 32
  %v1379 = vpop.permute.xlu0 %1378
  %v1380 = vsel %vm203, %v1379, 0
  %1382 = vmatprep.subr.mxu0 0.0
  %1383 = vmatpush1.msra.mxu0 %v44
  %1384 = vmatprep.subr.mxu0 0.0
  %1385 = vmatpush1.msra.mxu0 %v45
  %1386 = vmatprep.subr.mxu0 0.0
  %1387 = vmatpush1.msra.mxu0 %v46
  %1388 = vmatprep.subr.mxu0 0.0
  %1389 = vmatpush1.msra.mxu0 %v47
  %1390 = vmatprep.subr.mxu0 0.0
  %1391 = vmatpush1.msra.mxu0 0.0
  %1392 = vmatprep.subr.mxu0 0.0
  %1393 = vmatpush1.msra.mxu0 0.0
  %1394 = vmatprep.subr.mxu0 0.0
  %1395 = vmatpush1.msra.mxu0 0.0
  %1396 = vmatprep.subr.mxu0 0.0
  %1397 = vmatpush1.msra.mxu0 0.0
  %1398 = vmatprep.subr.mxu0 0.0
  %1399 = vmatpush1.msra.mxu0 0.0
  %1400 = vmatprep.subr.mxu0 0.0
  %1401 = vmatpush1.msra.mxu0 0.0
  %1402 = vmatprep.subr.mxu0 0.0
  %1403 = vmatpush1.msra.mxu0 0.0
  %1404 = vmatprep.subr.mxu0 0.0
  %1405 = vmatpush1.msra.mxu0 0.0
  %1406 = vmatprep.subr.mxu0 0.0
  %1407 = vmatpush1.msra.mxu0 0.0
  %1408 = vmatprep.subr.mxu0 0.0
  %1409 = vmatpush1.msra.mxu0 0.0
  %1410 = vmatprep.subr.mxu0 0.0
  %1411 = vmatpush1.msra.mxu0 0.0
  %1412 = vmatprep.subr.mxu0 0.0
  %1413 = vmatpush1.msra.mxu0 0.0
  %1414 = vmatprep.subr.mxu0 0.0
  %1415 = vmatpush1.msra.mxu0 0.0
  %1416 = vmatprep.subr.mxu0 0.0
  %1417 = vmatpush1.msra.mxu0 0.0
  %1418 = vmatprep.subr.mxu0 0.0
  %1419 = vmatpush1.msra.mxu0 0.0
  %1420 = vmatprep.subr.mxu0 0.0
  %1421 = vmatpush1.msra.mxu0 0.0
  %1422 = vmatprep.subr.mxu0 0.0
  %1423 = vmatpush1.msra.mxu0 0.0
  %1424 = vmatprep.subr.mxu0 0.0
  %1425 = vmatpush1.msra.mxu0 0.0
  %1426 = vmatprep.subr.mxu0 0.0
  %1427 = vmatpush1.msra.mxu0 0.0
  %1428 = vmatprep.subr.mxu0 0.0
  %1429 = vmatpush1.msra.mxu0 0.0
  %1430 = vmatprep.subr.mxu0 0.0
  %1431 = vmatpush1.msra.mxu0 0.0
  %1432 = vmatprep.subr.mxu0 0.0
  %1433 = vmatpush1.msra.mxu0 0.0
  %1434 = vmatprep.subr.mxu0 0.0
  %1435 = vmatpush1.msra.mxu0 0.0
  %1436 = vmatprep.subr.mxu0 0.0
  %1437 = vmatpush1.msra.mxu0 0.0
  %1438 = vmatprep.subr.mxu0 0.0
  %1439 = vmatpush1.msra.mxu0 0.0
  %1440 = vmatprep.subr.mxu0 0.0
  %1441 = vmatpush1.msra.mxu0 0.0
  %1442 = vmatprep.subr.mxu0 0.0
  %1443 = vmatpush1.msra.mxu0 0.0
  %1444 = vmatprep.subr.mxu0 0.0
  %1445 = vmatpush1.msra.mxu0 0.0
  %1446 = vmatprep.mubr.f32.mxu0 0.0
  %1447 = vmatmul.mubr.f32.gmra.mrb[0].mxu0 %v1380
  %v1448 = vpop.f32.mrb[0].mxu0
  %v1449 = vadd.f32 0.0, %v1448
  %v1450 = vpop.f32.mrb[0].mxu0
  %1451 = vdwg.mxu0
  %1453 = vrot.lane.b32.xlu0 %v1376, 32
  %v1454 = vpop.permute.xlu0 %1453
  %v1455 = vsel %vm203, %v1454, 0
  %1457 = vmatprep.subr.mxu0 0.0
  %1458 = vmatpush1.msra.mxu0 %v40
  %1459 = vmatprep.subr.mxu0 0.0
  %1460 = vmatpush1.msra.mxu0 %v41
  %1461 = vmatprep.subr.mxu0 0.0
  %1462 = vmatpush1.msra.mxu0 %v42
  %1463 = vmatprep.subr.mxu0 0.0
  %1464 = vmatpush1.msra.mxu0 %v43
  %1465 = vmatprep.subr.mxu0 0.0
  %1466 = vmatpush1.msra.mxu0 0.0
  %1467 = vmatprep.subr.mxu0 0.0
  %1468 = vmatpush1.msra.mxu0 0.0
  %1469 = vmatprep.subr.mxu0 0.0
  %1470 = vmatpush1.msra.mxu0 0.0
  %1471 = vmatprep.subr.mxu0 0.0
  %1472 = vmatpush1.msra.mxu0 0.0
  %1473 = vmatprep.subr.mxu0 0.0
  %1474 = vmatpush1.msra.mxu0 0.0
  %1475 = vmatprep.subr.mxu0 0.0
  %1476 = vmatpush1.msra.mxu0 0.0
  %1477 = vmatprep.subr.mxu0 0.0
  %1478 = vmatpush1.msra.mxu0 0.0
  %1479 = vmatprep.subr.mxu0 0.0
  %1480 = vmatpush1.msra.mxu0 0.0
  %1481 = vmatprep.subr.mxu0 0.0
  %1482 = vmatpush1.msra.mxu0 0.0
  %1483 = vmatprep.subr.mxu0 0.0
  %1484 = vmatpush1.msra.mxu0 0.0
  %1485 = vmatprep.subr.mxu0 0.0
  %1486 = vmatpush1.msra.mxu0 0.0
  %1487 = vmatprep.subr.mxu0 0.0
  %1488 = vmatpush1.msra.mxu0 0.0
  %1489 = vmatprep.subr.mxu0 0.0
  %1490 = vmatpush1.msra.mxu0 0.0
  %1491 = vmatprep.subr.mxu0 0.0
  %1492 = vmatpush1.msra.mxu0 0.0
  %1493 = vmatprep.subr.mxu0 0.0
  %1494 = vmatpush1.msra.mxu0 0.0
  %1495 = vmatprep.subr.mxu0 0.0
  %1496 = vmatpush1.msra.mxu0 0.0
  %1497 = vmatprep.subr.mxu0 0.0
  %1498 = vmatpush1.msra.mxu0 0.0
  %1499 = vmatprep.subr.mxu0 0.0
  %1500 = vmatpush1.msra.mxu0 0.0
  %1501 = vmatprep.subr.mxu0 0.0
  %1502 = vmatpush1.msra.mxu0 0.0
  %1503 = vmatprep.subr.mxu0 0.0
  %1504 = vmatpush1.msra.mxu0 0.0
  %1505 = vmatprep.subr.mxu0 0.0
  %1506 = vmatpush1.msra.mxu0 0.0
  %1507 = vmatprep.subr.mxu0 0.0
  %1508 = vmatpush1.msra.mxu0 0.0
  %1509 = vmatprep.subr.mxu0 0.0
  %1510 = vmatpush1.msra.mxu0 0.0
  %1511 = vmatprep.subr.mxu0 0.0
  %1512 = vmatpush1.msra.mxu0 0.0
  %1513 = vmatprep.subr.mxu0 0.0
  %1514 = vmatpush1.msra.mxu0 0.0
  %1515 = vmatprep.subr.mxu0 0.0
  %1516 = vmatpush1.msra.mxu0 0.0
  %1517 = vmatprep.subr.mxu0 0.0
  %1518 = vmatpush1.msra.mxu0 0.0
  %1519 = vmatprep.subr.mxu0 0.0
  %1520 = vmatpush1.msra.mxu0 0.0
  %1521 = vmatprep.mubr.f32.mxu0 0.0
  %1522 = vmatmul.mubr.f32.gmra.mrb[0].mxu0 %v1455
  %v1523 = vpop.f32.mrb[0].mxu0
  %v1524 = vadd.f32 %v1449, %v1523
  %v1525 = vpop.f32.mrb[0].mxu0
  %1526 = vdwg.mxu0
  %v1527 = vadd.f32 %v1524, %v201
  %v1528 = vxor.u32 %v1527, 2147483648
  %v1529 = vmul.f32 %v1528, 1.442695
  %v1530 = vpow.pop %v1529
  %v1531 = vadd.f32 %v1530, 1.0
  %v1532 = vrcp.pop %v1531
  %v1533 = vmul.f32 1.0, %v1532
  %v1534 = vtanh.pop %v1527
  %v1535 = vmul.f32 %v1533, %v1275
  %1537 = vrot.lane.b32.xlu0 %v1534, 64
  %v1538 = vpop.permute.xlu0 %1537
  %v1540 = vmul.f32 %v1533, %v1538
  %1542 = vrot.lane.b32.xlu0 %v1540, 32
  %v1543 = vpop.permute.xlu0 %1542
  %v1545 = vadd.f32 %v1535, %v1543
  %v1546 = vtanh.pop %v1545
  %1548 = vrot.lane.b32.xlu0 %v1546, 64
  %v1549 = vpop.permute.xlu0 %1548
  %v1551 = vmul.f32 %v1533, %v1549
  %1552 = vmatprep.subr.mxu0 0.0
  %1553 = vmatpush1.msra.mxu0 %v35
  %1554 = vmatprep.subr.mxu0 0.0
  %1555 = vmatpush1.msra.mxu0 %v36
  %1556 = vmatprep.subr.mxu0 0.0
  %1557 = vmatpush1.msra.mxu0 %v37
  %1558 = vmatprep.subr.mxu0 0.0
  %1559 = vmatpush1.msra.mxu0 %v38
  %1560 = vmatprep.subr.mxu0 0.0
  %1561 = vmatpush1.msra.mxu0 0.0
  %1562 = vmatprep.subr.mxu0 0.0
  %1563 = vmatpush1.msra.mxu0 0.0
  %1564 = vmatprep.subr.mxu0 0.0
  %1565 = vmatpush1.msra.mxu0 0.0
  %1566 = vmatprep.subr.mxu0 0.0
  %1567 = vmatpush1.msra.mxu0 0.0
  %1568 = vmatprep.subr.mxu0 0.0
  %1569 = vmatpush1.msra.mxu0 0.0
  %1570 = vmatprep.subr.mxu0 0.0
  %1571 = vmatpush1.msra.mxu0 0.0
  %1572 = vmatprep.subr.mxu0 0.0
  %1573 = vmatpush1.msra.mxu0 0.0
  %1574 = vmatprep.subr.mxu0 0.0
  %1575 = vmatpush1.msra.mxu0 0.0
  %1576 = vmatprep.subr.mxu0 0.0
  %1577 = vmatpush1.msra.mxu0 0.0
  %1578 = vmatprep.subr.mxu0 0.0
  %1579 = vmatpush1.msra.mxu0 0.0
  %1580 = vmatprep.subr.mxu0 0.0
  %1581 = vmatpush1.msra.mxu0 0.0
  %1582 = vmatprep.subr.mxu0 0.0
  %1583 = vmatpush1.msra.mxu0 0.0
  %1584 = vmatprep.subr.mxu0 0.0
  %1585 = vmatpush1.msra.mxu0 0.0
  %1586 = vmatprep.subr.mxu0 0.0
  %1587 = vmatpush1.msra.mxu0 0.0
  %1588 = vmatprep.subr.mxu0 0.0
  %1589 = vmatpush1.msra.mxu0 0.0
  %1590 = vmatprep.subr.mxu0 0.0
  %1591 = vmatpush1.msra.mxu0 0.0
  %1592 = vmatprep.subr.mxu0 0.0
  %1593 = vmatpush1.msra.mxu0 0.0
  %1594 = vmatprep.subr.mxu0 0.0
  %1595 = vmatpush1.msra.mxu0 0.0
  %1596 = vmatprep.subr.mxu0 0.0
  %1597 = vmatpush1.msra.mxu0 0.0
  %1598 = vmatprep.subr.mxu0 0.0
  %1599 = vmatpush1.msra.mxu0 0.0
  %1600 = vmatprep.subr.mxu0 0.0
  %1601 = vmatpush1.msra.mxu0 0.0
  %1602 = vmatprep.subr.mxu0 0.0
  %1603 = vmatpush1.msra.mxu0 0.0
  %1604 = vmatprep.subr.mxu0 0.0
  %1605 = vmatpush1.msra.mxu0 0.0
  %1606 = vmatprep.subr.mxu0 0.0
  %1607 = vmatpush1.msra.mxu0 0.0
  %1608 = vmatprep.subr.mxu0 0.0
  %1609 = vmatpush1.msra.mxu0 0.0
  %1610 = vmatprep.subr.mxu0 0.0
  %1611 = vmatpush1.msra.mxu0 0.0
  %1612 = vmatprep.subr.mxu0 0.0
  %1613 = vmatpush1.msra.mxu0 0.0
  %1614 = vmatprep.subr.mxu0 0.0
  %1615 = vmatpush1.msra.mxu0 0.0
  %1616 = vmatprep.mubr.f32.mxu0 0.0
  %1617 = vmatmul.mubr.f32.gmra.mrb[0].mxu0 %v1455
  %v1618 = vpop.f32.mrb[0].mxu0
  %v1619 = vadd.f32 0.0, %v1618
  %v1620 = vpop.f32.mrb[0].mxu0
  %1621 = vdwg.mxu0
  %v1622 = vadd.f32 %v183, %v1619
  %v1623 = vxor.u32 %v1622, 2147483648
  %v1624 = vmul.f32 %v1623, 1.442695
  %v1625 = vpow.pop %v1624
  %v1626 = vadd.f32 %v1625, 1.0
  %v1627 = vrcp.pop %v1626
  %v1628 = vmul.f32 1.0, %v1627
  %v1629 = vtanh.pop %v1622
  %v1630 = vmul.f32 %v1628, %v1370
  %1632 = vrot.lane.b32.xlu0 %v1629, 64
  %v1633 = vpop.permute.xlu0 %1632
  %v1635 = vmul.f32 %v1628, %v1633
  %1637 = vrot.lane.b32.xlu0 %v1635, 32
  %v1638 = vpop.permute.xlu0 %1637
  %v1640 = vadd.f32 %v1630, %v1638
  %v1641 = vtanh.pop %v1640
  %1643 = vrot.lane.b32.xlu0 %v1641, 64
  %v1644 = vpop.permute.xlu0 %1643
  %v1646 = vmul.f32 %v1628, %v1644
  %1648 = vrot.lane.b32.xlu0 %v1551, 32
  %v1649 = vpop.permute.xlu0 %1648
  %v1650 = vsel %vm203, %v1649, 0
  %1652 = vmatprep.subr.mxu0 0.0
  %1653 = vmatpush1.msra.mxu0 %v44
  %1654 = vmatprep.subr.mxu0 0.0
  %1655 = vmatpush1.msra.mxu0 %v45
  %1656 = vmatprep.subr.mxu0 0.0
  %1657 = vmatpush1.msra.mxu0 %v46
  %1658 = vmatprep.subr.mxu0 0.0
  %1659 = vmatpush1.msra.mxu0 %v47
  %1660 = vmatprep.subr.mxu0 0.0
  %1661 = vmatpush1.msra.mxu0 0.0
  %1662 = vmatprep.subr.mxu0 0.0
  %1663 = vmatpush1.msra.mxu0 0.0
  %1664 = vmatprep.subr.mxu0 0.0
  %1665 = vmatpush1.msra.mxu0 0.0
  %1666 = vmatprep.subr.mxu0 0.0
  %1667 = vmatpush1.msra.mxu0 0.0
  %1668 = vmatprep.subr.mxu0 0.0
  %1669 = vmatpush1.msra.mxu0 0.0
  %1670 = vmatprep.subr.mxu0 0.0
  %1671 = vmatpush1.msra.mxu0 0.0
  %1672 = vmatprep.subr.mxu0 0.0
  %1673 = vmatpush1.msra.mxu0 0.0
  %1674 = vmatprep.subr.mxu0 0.0
  %1675 = vmatpush1.msra.mxu0 0.0
  %1676 = vmatprep.subr.mxu0 0.0
  %1677 = vmatpush1.msra.mxu0 0.0
  %1678 = vmatprep.subr.mxu0 0.0
  %1679 = vmatpush1.msra.mxu0 0.0
  %1680 = vmatprep.subr.mxu0 0.0
  %1681 = vmatpush1.msra.mxu0 0.0
  %1682 = vmatprep.subr.mxu0 0.0
  %1683 = vmatpush1.msra.mxu0 0.0
  %1684 = vmatprep.subr.mxu0 0.0
  %1685 = vmatpush1.msra.mxu0 0.0
  %1686 = vmatprep.subr.mxu0 0.0
  %1687 = vmatpush1.msra.mxu0 0.0
  %1688 = vmatprep.subr.mxu0 0.0
  %1689 = vmatpush1.msra.mxu0 0.0
  %1690 = vmatprep.subr.mxu0 0.0
  %1691 = vmatpush1.msra.mxu0 0.0
  %1692 = vmatprep.subr.mxu0 0.0
  %1693 = vmatpush1.msra.mxu0 0.0
  %1694 = vmatprep.subr.mxu0 0.0
  %1695 = vmatpush1.msra.mxu0 0.0
  %1696 = vmatprep.subr.mxu0 0.0
  %1697 = vmatpush1.msra.mxu0 0.0
  %1698 = vmatprep.subr.mxu0 0.0
  %1699 = vmatpush1.msra.mxu0 0.0
  %1700 = vmatprep.subr.mxu0 0.0
  %1701 = vmatpush1.msra.mxu0 0.0
  %1702 = vmatprep.subr.mxu0 0.0
  %1703 = vmatpush1.msra.mxu0 0.0
  %1704 = vmatprep.subr.mxu0 0.0
  %1705 = vmatpush1.msra.mxu0 0.0
  %1706 = vmatprep.subr.mxu0 0.0
  %1707 = vmatpush1.msra.mxu0 0.0
  %1708 = vmatprep.subr.mxu0 0.0
  %1709 = vmatpush1.msra.mxu0 0.0
  %1710 = vmatprep.subr.mxu0 0.0
  %1711 = vmatpush1.msra.mxu0 0.0
  %1712 = vmatprep.subr.mxu0 0.0
  %1713 = vmatpush1.msra.mxu0 0.0
  %1714 = vmatprep.subr.mxu0 0.0
  %1715 = vmatpush1.msra.mxu0 0.0
  %1716 = vmatprep.mubr.f32.mxu0 0.0
  %1717 = vmatmul.mubr.f32.gmra.mrb[0].mxu0 %v1650
  %v1718 = vpop.f32.mrb[0].mxu0
  %v1719 = vadd.f32 0.0, %v1718
  %v1720 = vpop.f32.mrb[0].mxu0
  %1721 = vdwg.mxu0
  %1723 = vrot.lane.b32.xlu0 %v1646, 32
  %v1724 = vpop.permute.xlu0 %1723
  %v1725 = vsel %vm203, %v1724, 0
  %1727 = vmatprep.subr.mxu0 0.0
  %1728 = vmatpush1.msra.mxu0 %v40
  %1729 = vmatprep.subr.mxu0 0.0
  %1730 = vmatpush1.msra.mxu0 %v41
  %1731 = vmatprep.subr.mxu0 0.0
  %1732 = vmatpush1.msra.mxu0 %v42
  %1733 = vmatprep.subr.mxu0 0.0
  %1734 = vmatpush1.msra.mxu0 %v43
  %1735 = vmatprep.subr.mxu0 0.0
  %1736 = vmatpush1.msra.mxu0 0.0
  %1737 = vmatprep.subr.mxu0 0.0
  %1738 = vmatpush1.msra.mxu0 0.0
  %1739 = vmatprep.subr.mxu0 0.0
  %1740 = vmatpush1.msra.mxu0 0.0
  %1741 = vmatprep.subr.mxu0 0.0
  %1742 = vmatpush1.msra.mxu0 0.0
  %1743 = vmatprep.subr.mxu0 0.0
  %1744 = vmatpush1.msra.mxu0 0.0
  %1745 = vmatprep.subr.mxu0 0.0
  %1746 = vmatpush1.msra.mxu0 0.0
  %1747 = vmatprep.subr.mxu0 0.0
  %1748 = vmatpush1.msra.mxu0 0.0
  %1749 = vmatprep.subr.mxu0 0.0
  %1750 = vmatpush1.msra.mxu0 0.0
  %1751 = vmatprep.subr.mxu0 0.0
  %1752 = vmatpush1.msra.mxu0 0.0
  %1753 = vmatprep.subr.mxu0 0.0
  %1754 = vmatpush1.msra.mxu0 0.0
  %1755 = vmatprep.subr.mxu0 0.0
  %1756 = vmatpush1.msra.mxu0 0.0
  %1757 = vmatprep.subr.mxu0 0.0
  %1758 = vmatpush1.msra.mxu0 0.0
  %1759 = vmatprep.subr.mxu0 0.0
  %1760 = vmatpush1.msra.mxu0 0.0
  %1761 = vmatprep.subr.mxu0 0.0
  %1762 = vmatpush1.msra.mxu0 0.0
  %1763 = vmatprep.subr.mxu0 0.0
  %1764 = vmatpush1.msra.mxu0 0.0
  %1765 = vmatprep.subr.mxu0 0.0
  %1766 = vmatpush1.msra.mxu0 0.0
  %1767 = vmatprep.subr.mxu0 0.0
  %1768 = vmatpush1.msra.mxu0 0.0
  %1769 = vmatprep.subr.mxu0 0.0
  %1770 = vmatpush1.msra.mxu0 0.0
  %1771 = vmatprep.subr.mxu0 0.0
  %1772 = vmatpush1.msra.mxu0 0.0
  %1773 = vmatprep.subr.mxu0 0.0
  %1774 = vmatpush1.msra.mxu0 0.0
  %1775 = vmatprep.subr.mxu0 0.0
  %1776 = vmatpush1.msra.mxu0 0.0
  %1777 = vmatprep.subr.mxu0 0.0
  %1778 = vmatpush1.msra.mxu0 0.0
  %1779 = vmatprep.subr.mxu0 0.0
  %1780 = vmatpush1.msra.mxu0 0.0
  %1781 = vmatprep.subr.mxu0 0.0
  %1782 = vmatpush1.msra.mxu0 0.0
  %1783 = vmatprep.subr.mxu0 0.0
  %1784 = vmatpush1.msra.mxu0 0.0
  %1785 = vmatprep.subr.mxu0 0.0
  %1786 = vmatpush1.msra.mxu0 0.0
  %1787 = vmatprep.subr.mxu0 0.0
  %1788 = vmatpush1.msra.mxu0 0.0
  %1789 = vmatprep.subr.mxu0 0.0
  %1790 = vmatpush1.msra.mxu0 0.0
  %1791 = vmatprep.mubr.f32.mxu0 0.0
  %1792 = vmatmul.mubr.f32.gmra.mrb[0].mxu0 %v1725
  %v1793 = vpop.f32.mrb[0].mxu0
  %v1794 = vadd.f32 %v1719, %v1793
  %v1795 = vpop.f32.mrb[0].mxu0
  %1796 = vdwg.mxu0
  %v1797 = vadd.f32 %v1794, %v201
  %v1798 = vxor.u32 %v1797, 2147483648
  %v1799 = vmul.f32 %v1798, 1.442695
  %v1800 = vpow.pop %v1799
  %v1801 = vadd.f32 %v1800, 1.0
  %v1802 = vrcp.pop %v1801
  %v1803 = vmul.f32 1.0, %v1802
  %v1804 = vtanh.pop %v1797
  %v1805 = vmul.f32 %v1803, %v1545
  %1807 = vrot.lane.b32.xlu0 %v1804, 64
  %v1808 = vpop.permute.xlu0 %1807
  %v1810 = vmul.f32 %v1803, %v1808
  %1812 = vrot.lane.b32.xlu0 %v1810, 32
  %v1813 = vpop.permute.xlu0 %1812
  %v1815 = vadd.f32 %v1805, %v1813
  %v1816 = vtanh.pop %v1815
  %1818 = vrot.lane.b32.xlu0 %v1816, 64
  %v1819 = vpop.permute.xlu0 %1818
  %v1821 = vmul.f32 %v1803, %v1819
  %1822 = vmatprep.subr.mxu0 0.0
  %1823 = vmatpush1.msra.mxu0 %v35
  %1824 = vmatprep.subr.mxu0 0.0
  %1825 = vmatpush1.msra.mxu0 %v36
  %1826 = vmatprep.subr.mxu0 0.0
  %1827 = vmatpush1.msra.mxu0 %v37
  %1828 = vmatprep.subr.mxu0 0.0
  %1829 = vmatpush1.msra.mxu0 %v38
  %1830 = vmatprep.subr.mxu0 0.0
  %1831 = vmatpush1.msra.mxu0 0.0
  %1832 = vmatprep.subr.mxu0 0.0
  %1833 = vmatpush1.msra.mxu0 0.0
  %1834 = vmatprep.subr.mxu0 0.0
  %1835 = vmatpush1.msra.mxu0 0.0
  %1836 = vmatprep.subr.mxu0 0.0
  %1837 = vmatpush1.msra.mxu0 0.0
  %1838 = vmatprep.subr.mxu0 0.0
  %1839 = vmatpush1.msra.mxu0 0.0
  %1840 = vmatprep.subr.mxu0 0.0
  %1841 = vmatpush1.msra.mxu0 0.0
  %1842 = vmatprep.subr.mxu0 0.0
  %1843 = vmatpush1.msra.mxu0 0.0
  %1844 = vmatprep.subr.mxu0 0.0
  %1845 = vmatpush1.msra.mxu0 0.0
  %1846 = vmatprep.subr.mxu0 0.0
  %1847 = vmatpush1.msra.mxu0 0.0
  %1848 = vmatprep.subr.mxu0 0.0
  %1849 = vmatpush1.msra.mxu0 0.0
  %1850 = vmatprep.subr.mxu0 0.0
  %1851 = vmatpush1.msra.mxu0 0.0
  %1852 = vmatprep.subr.mxu0 0.0
  %1853 = vmatpush1.msra.mxu0 0.0
  %1854 = vmatprep.subr.mxu0 0.0
  %1855 = vmatpush1.msra.mxu0 0.0
  %1856 = vmatprep.subr.mxu0 0.0
  %1857 = vmatpush1.msra.mxu0 0.0
  %1858 = vmatprep.subr.mxu0 0.0
  %1859 = vmatpush1.msra.mxu0 0.0
  %1860 = vmatprep.subr.mxu0 0.0
  %1861 = vmatpush1.msra.mxu0 0.0
  %1862 = vmatprep.subr.mxu0 0.0
  %1863 = vmatpush1.msra.mxu0 0.0
  %1864 = vmatprep.subr.mxu0 0.0
  %1865 = vmatpush1.msra.mxu0 0.0
  %1866 = vmatprep.subr.mxu0 0.0
  %1867 = vmatpush1.msra.mxu0 0.0
  %1868 = vmatprep.subr.mxu0 0.0
  %1869 = vmatpush1.msra.mxu0 0.0
  %1870 = vmatprep.subr.mxu0 0.0
  %1871 = vmatpush1.msra.mxu0 0.0
  %1872 = vmatprep.subr.mxu0 0.0
  %1873 = vmatpush1.msra.mxu0 0.0
  %1874 = vmatprep.subr.mxu0 0.0
  %1875 = vmatpush1.msra.mxu0 0.0
  %1876 = vmatprep.subr.mxu0 0.0
  %1877 = vmatpush1.msra.mxu0 0.0
  %1878 = vmatprep.subr.mxu0 0.0
  %1879 = vmatpush1.msra.mxu0 0.0
  %1880 = vmatprep.subr.mxu0 0.0
  %1881 = vmatpush1.msra.mxu0 0.0
  %1882 = vmatprep.subr.mxu0 0.0
  %1883 = vmatpush1.msra.mxu0 0.0
  %1884 = vmatprep.subr.mxu0 0.0
  %1885 = vmatpush1.msra.mxu0 0.0
  %1886 = vmatprep.mubr.f32.mxu0 0.0
  %1887 = vmatmul.mubr.f32.gmra.mrb[0].mxu0 %v1725
  %v1888 = vpop.f32.mrb[0].mxu0
  %v1889 = vadd.f32 0.0, %v1888
  %v1890 = vpop.f32.mrb[0].mxu0
  %1891 = vdwg.mxu0
  %v1892 = vadd.f32 %v188, %v1889
  %v1893 = vxor.u32 %v1892, 2147483648
  %v1894 = vmul.f32 %v1893, 1.442695
  %v1895 = vpow.pop %v1894
  %v1896 = vadd.f32 %v1895, 1.0
  %v1897 = vrcp.pop %v1896
  %v1898 = vmul.f32 1.0, %v1897
  %v1899 = vtanh.pop %v1892
  %v1900 = vmul.f32 %v1898, %v1640
  %1902 = vrot.lane.b32.xlu0 %v1899, 64
  %v1903 = vpop.permute.xlu0 %1902
  %v1905 = vmul.f32 %v1898, %v1903
  %1907 = vrot.lane.b32.xlu0 %v1905, 32
  %v1908 = vpop.permute.xlu0 %1907
  %v1910 = vadd.f32 %v1900, %v1908
  %v1911 = vtanh.pop %v1910
  %1913 = vrot.lane.b32.xlu0 %v1911, 64
  %v1914 = vpop.permute.xlu0 %1913
  %v1916 = vmul.f32 %v1898, %v1914
  %1918 = vrot.lane.b32.xlu0 %v1821, 32
  %v1919 = vpop.permute.xlu0 %1918
  %v1920 = vsel %vm203, %v1919, 0
  %1922 = vmatprep.subr.mxu0 0.0
  %1923 = vmatpush1.msra.mxu0 %v44
  %1924 = vmatprep.subr.mxu0 0.0
  %1925 = vmatpush1.msra.mxu0 %v45
  %1926 = vmatprep.subr.mxu0 0.0
  %1927 = vmatpush1.msra.mxu0 %v46
  %1928 = vmatprep.subr.mxu0 0.0
  %1929 = vmatpush1.msra.mxu0 %v47
  %1930 = vmatprep.subr.mxu0 0.0
  %1931 = vmatpush1.msra.mxu0 0.0
  %1932 = vmatprep.subr.mxu0 0.0
  %1933 = vmatpush1.msra.mxu0 0.0
  %1934 = vmatprep.subr.mxu0 0.0
  %1935 = vmatpush1.msra.mxu0 0.0
  %1936 = vmatprep.subr.mxu0 0.0
  %1937 = vmatpush1.msra.mxu0 0.0
  %1938 = vmatprep.subr.mxu0 0.0
  %1939 = vmatpush1.msra.mxu0 0.0
  %1940 = vmatprep.subr.mxu0 0.0
  %1941 = vmatpush1.msra.mxu0 0.0
  %1942 = vmatprep.subr.mxu0 0.0
  %1943 = vmatpush1.msra.mxu0 0.0
  %1944 = vmatprep.subr.mxu0 0.0
  %1945 = vmatpush1.msra.mxu0 0.0
  %1946 = vmatprep.subr.mxu0 0.0
  %1947 = vmatpush1.msra.mxu0 0.0
  %1948 = vmatprep.subr.mxu0 0.0
  %1949 = vmatpush1.msra.mxu0 0.0
  %1950 = vmatprep.subr.mxu0 0.0
  %1951 = vmatpush1.msra.mxu0 0.0
  %1952 = vmatprep.subr.mxu0 0.0
  %1953 = vmatpush1.msra.mxu0 0.0
  %1954 = vmatprep.subr.mxu0 0.0
  %1955 = vmatpush1.msra.mxu0 0.0
  %1956 = vmatprep.subr.mxu0 0.0
  %1957 = vmatpush1.msra.mxu0 0.0
  %1958 = vmatprep.subr.mxu0 0.0
  %1959 = vmatpush1.msra.mxu0 0.0
  %1960 = vmatprep.subr.mxu0 0.0
  %1961 = vmatpush1.msra.mxu0 0.0
  %1962 = vmatprep.subr.mxu0 0.0
  %1963 = vmatpush1.msra.mxu0 0.0
  %1964 = vmatprep.subr.mxu0 0.0
  %1965 = vmatpush1.msra.mxu0 0.0
  %1966 = vmatprep.subr.mxu0 0.0
  %1967 = vmatpush1.msra.mxu0 0.0
  %1968 = vmatprep.subr.mxu0 0.0
  %1969 = vmatpush1.msra.mxu0 0.0
  %1970 = vmatprep.subr.mxu0 0.0
  %1971 = vmatpush1.msra.mxu0 0.0
  %1972 = vmatprep.subr.mxu0 0.0
  %1973 = vmatpush1.msra.mxu0 0.0
  %1974 = vmatprep.subr.mxu0 0.0
  %1975 = vmatpush1.msra.mxu0 0.0
  %1976 = vmatprep.subr.mxu0 0.0
  %1977 = vmatpush1.msra.mxu0 0.0
  %1978 = vmatprep.subr.mxu0 0.0
  %1979 = vmatpush1.msra.mxu0 0.0
  %1980 = vmatprep.subr.mxu0 0.0
  %1981 = vmatpush1.msra.mxu0 0.0
  %1982 = vmatprep.subr.mxu0 0.0
  %1983 = vmatpush1.msra.mxu0 0.0
  %1984 = vmatprep.subr.mxu0 0.0
  %1985 = vmatpush1.msra.mxu0 0.0
  %1986 = vmatprep.mubr.f32.mxu0 0.0
  %1987 = vmatmul.mubr.f32.gmra.mrb[0].mxu0 %v1920
  %v1988 = vpop.f32.mrb[0].mxu0
  %v1989 = vadd.f32 0.0, %v1988
  %v1990 = vpop.f32.mrb[0].mxu0
  %1991 = vdwg.mxu0
  %1993 = vrot.lane.b32.xlu0 %v1916, 32
  %v1994 = vpop.permute.xlu0 %1993
  %v1995 = vsel %vm203, %v1994, 0
  %1997 = vmatprep.subr.mxu0 0.0
  %1998 = vmatpush1.msra.mxu0 %v40
  %1999 = vmatprep.subr.mxu0 0.0
  %2000 = vmatpush1.msra.mxu0 %v41
  %2001 = vmatprep.subr.mxu0 0.0
  %2002 = vmatpush1.msra.mxu0 %v42
  %2003 = vmatprep.subr.mxu0 0.0
  %2004 = vmatpush1.msra.mxu0 %v43
  %2005 = vmatprep.subr.mxu0 0.0
  %2006 = vmatpush1.msra.mxu0 0.0
  %2007 = vmatprep.subr.mxu0 0.0
  %2008 = vmatpush1.msra.mxu0 0.0
  %2009 = vmatprep.subr.mxu0 0.0
  %2010 = vmatpush1.msra.mxu0 0.0
  %2011 = vmatprep.subr.mxu0 0.0
  %2012 = vmatpush1.msra.mxu0 0.0
  %2013 = vmatprep.subr.mxu0 0.0
  %2014 = vmatpush1.msra.mxu0 0.0
  %2015 = vmatprep.subr.mxu0 0.0
  %2016 = vmatpush1.msra.mxu0 0.0
  %2017 = vmatprep.subr.mxu0 0.0
  %2018 = vmatpush1.msra.mxu0 0.0
  %2019 = vmatprep.subr.mxu0 0.0
  %2020 = vmatpush1.msra.mxu0 0.0
  %2021 = vmatprep.subr.mxu0 0.0
  %2022 = vmatpush1.msra.mxu0 0.0
  %2023 = vmatprep.subr.mxu0 0.0
  %2024 = vmatpush1.msra.mxu0 0.0
  %2025 = vmatprep.subr.mxu0 0.0
  %2026 = vmatpush1.msra.mxu0 0.0
  %2027 = vmatprep.subr.mxu0 0.0
  %2028 = vmatpush1.msra.mxu0 0.0
  %2029 = vmatprep.subr.mxu0 0.0
  %2030 = vmatpush1.msra.mxu0 0.0
  %2031 = vmatprep.subr.mxu0 0.0
  %2032 = vmatpush1.msra.mxu0 0.0
  %2033 = vmatprep.subr.mxu0 0.0
  %2034 = vmatpush1.msra.mxu0 0.0
  %2035 = vmatprep.subr.mxu0 0.0
  %2036 = vmatpush1.msra.mxu0 0.0
  %2037 = vmatprep.subr.mxu0 0.0
  %2038 = vmatpush1.msra.mxu0 0.0
  %2039 = vmatprep.subr.mxu0 0.0
  %2040 = vmatpush1.msra.mxu0 0.0
  %2041 = vmatprep.subr.mxu0 0.0
  %2042 = vmatpush1.msra.mxu0 0.0
  %2043 = vmatprep.subr.mxu0 0.0
  %2044 = vmatpush1.msra.mxu0 0.0
  %2045 = vmatprep.subr.mxu0 0.0
  %2046 = vmatpush1.msra.mxu0 0.0
  %2047 = vmatprep.subr.mxu0 0.0
  %2048 = vmatpush1.msra.mxu0 0.0
  %2049 = vmatprep.subr.mxu0 0.0
  %2050 = vmatpush1.msra.mxu0 0.0
  %2051 = vmatprep.subr.mxu0 0.0
  %2052 = vmatpush1.msra.mxu0 0.0
  %2053 = vmatprep.subr.mxu0 0.0
  %2054 = vmatpush1.msra.mxu0 0.0
  %2055 = vmatprep.subr.mxu0 0.0
  %2056 = vmatpush1.msra.mxu0 0.0
  %2057 = vmatprep.subr.mxu0 0.0
  %2058 = vmatpush1.msra.mxu0 0.0
  %2059 = vmatprep.subr.mxu0 0.0
  %2060 = vmatpush1.msra.mxu0 0.0
  %2061 = vmatprep.mubr.f32.mxu0 0.0
  %2062 = vmatmul.mubr.f32.gmra.mrb[0].mxu0 %v1995
  %v2063 = vpop.f32.mrb[0].mxu0
  %v2064 = vadd.f32 %v1989, %v2063
  %v2065 = vpop.f32.mrb[0].mxu0
  %2066 = vdwg.mxu0
  %v2067 = vadd.f32 %v2064, %v201
  %v2068 = vxor.u32 %v2067, 2147483648
  %v2069 = vmul.f32 %v2068, 1.442695
  %v2070 = vpow.pop %v2069
  %v2071 = vadd.f32 %v2070, 1.0
  %v2072 = vrcp.pop %v2071
  %v2073 = vmul.f32 1.0, %v2072
  %v2074 = vtanh.pop %v2067
  %v2075 = vmul.f32 %v2073, %v1815
  %2077 = vrot.lane.b32.xlu0 %v2074, 64
  %v2078 = vpop.permute.xlu0 %2077
  %v2080 = vmul.f32 %v2073, %v2078
  %2082 = vrot.lane.b32.xlu0 %v2080, 32
  %v2083 = vpop.permute.xlu0 %2082
  %v2085 = vadd.f32 %v2075, %v2083
  %v2086 = vtanh.pop %v2085
  %2088 = vrot.lane.b32.xlu0 %v2086, 64
  %v2089 = vpop.permute.xlu0 %2088
  %v2091 = vmul.f32 %v2073, %v2089
  %2092 = vmatprep.subr.mxu0 0.0
  %2093 = vmatpush1.msra.mxu0 %v35
  %2094 = vmatprep.subr.mxu0 0.0
  %2095 = vmatpush1.msra.mxu0 %v36
  %2096 = vmatprep.subr.mxu0 0.0
  %2097 = vmatpush1.msra.mxu0 %v37
  %2098 = vmatprep.subr.mxu0 0.0
  %2099 = vmatpush1.msra.mxu0 %v38
  %2100 = vmatprep.subr.mxu0 0.0
  %2101 = vmatpush1.msra.mxu0 0.0
  %2102 = vmatprep.subr.mxu0 0.0
  %2103 = vmatpush1.msra.mxu0 0.0
  %2104 = vmatprep.subr.mxu0 0.0
  %2105 = vmatpush1.msra.mxu0 0.0
  %2106 = vmatprep.subr.mxu0 0.0
  %2107 = vmatpush1.msra.mxu0 0.0
  %2108 = vmatprep.subr.mxu0 0.0
  %2109 = vmatpush1.msra.mxu0 0.0
  %2110 = vmatprep.subr.mxu0 0.0
  %2111 = vmatpush1.msra.mxu0 0.0
  %2112 = vmatprep.subr.mxu0 0.0
  %2113 = vmatpush1.msra.mxu0 0.0
  %2114 = vmatprep.subr.mxu0 0.0
  %2115 = vmatpush1.msra.mxu0 0.0
  %2116 = vmatprep.subr.mxu0 0.0
  %2117 = vmatpush1.msra.mxu0 0.0
  %2118 = vmatprep.subr.mxu0 0.0
  %2119 = vmatpush1.msra.mxu0 0.0
  %2120 = vmatprep.subr.mxu0 0.0
  %2121 = vmatpush1.msra.mxu0 0.0
  %2122 = vmatprep.subr.mxu0 0.0
  %2123 = vmatpush1.msra.mxu0 0.0
  %2124 = vmatprep.subr.mxu0 0.0
  %2125 = vmatpush1.msra.mxu0 0.0
  %2126 = vmatprep.subr.mxu0 0.0
  %2127 = vmatpush1.msra.mxu0 0.0
  %2128 = vmatprep.subr.mxu0 0.0
  %2129 = vmatpush1.msra.mxu0 0.0
  %2130 = vmatprep.subr.mxu0 0.0
  %2131 = vmatpush1.msra.mxu0 0.0
  %2132 = vmatprep.subr.mxu0 0.0
  %2133 = vmatpush1.msra.mxu0 0.0
  %2134 = vmatprep.subr.mxu0 0.0
  %2135 = vmatpush1.msra.mxu0 0.0
  %2136 = vmatprep.subr.mxu0 0.0
  %2137 = vmatpush1.msra.mxu0 0.0
  %2138 = vmatprep.subr.mxu0 0.0
  %2139 = vmatpush1.msra.mxu0 0.0
  %2140 = vmatprep.subr.mxu0 0.0
  %2141 = vmatpush1.msra.mxu0 0.0
  %2142 = vmatprep.subr.mxu0 0.0
  %2143 = vmatpush1.msra.mxu0 0.0
  %2144 = vmatprep.subr.mxu0 0.0
  %2145 = vmatpush1.msra.mxu0 0.0
  %2146 = vmatprep.subr.mxu0 0.0
  %2147 = vmatpush1.msra.mxu0 0.0
  %2148 = vmatprep.subr.mxu0 0.0
  %2149 = vmatpush1.msra.mxu0 0.0
  %2150 = vmatprep.subr.mxu0 0.0
  %2151 = vmatpush1.msra.mxu0 0.0
  %2152 = vmatprep.subr.mxu0 0.0
  %2153 = vmatpush1.msra.mxu0 0.0
  %2154 = vmatprep.subr.mxu0 0.0
  %2155 = vmatpush1.msra.mxu0 0.0
  %2156 = vmatprep.mubr.f32.mxu0 0.0
  %2157 = vmatmul.mubr.f32.gmra.mrb[0].mxu0 %v1995
  %v2158 = vpop.f32.mrb[0].mxu0
  %v2159 = vadd.f32 0.0, %v2158
  %v2160 = vpop.f32.mrb[0].mxu0
  %2161 = vdwg.mxu0
  %v2162 = vadd.f32 %v193, %v2159
  %v2163 = vxor.u32 %v2162, 2147483648
  %v2164 = vmul.f32 %v2163, 1.442695
  %v2165 = vpow.pop %v2164
  %v2166 = vadd.f32 %v2165, 1.0
  %v2167 = vrcp.pop %v2166
  %v2168 = vmul.f32 1.0, %v2167
  %v2169 = vtanh.pop %v2162
  %v2170 = vmul.f32 %v2168, %v1910
  %2172 = vrot.lane.b32.xlu0 %v2169, 64
  %v2173 = vpop.permute.xlu0 %2172
  %v2175 = vmul.f32 %v2168, %v2173
  %2177 = vrot.lane.b32.xlu0 %v2175, 32
  %v2178 = vpop.permute.xlu0 %2177
  %v2180 = vadd.f32 %v2170, %v2178
  %v2181 = vtanh.pop %v2180
  %2183 = vrot.lane.b32.xlu0 %v2181, 64
  %v2184 = vpop.permute.xlu0 %2183
  %v2186 = vmul.f32 %v2168, %v2184
  %2188 = vrot.lane.b32.xlu0 %v2091, 32
  %v2189 = vpop.permute.xlu0 %2188
  %v2190 = vsel %vm203, %v2189, 0
  %2192 = vmatprep.subr.mxu0 0.0
  %2193 = vmatpush1.msra.mxu0 %v44
  %2194 = vmatprep.subr.mxu0 0.0
  %2195 = vmatpush1.msra.mxu0 %v45
  %2196 = vmatprep.subr.mxu0 0.0
  %2197 = vmatpush1.msra.mxu0 %v46
  %2198 = vmatprep.subr.mxu0 0.0
  %2199 = vmatpush1.msra.mxu0 %v47
  %2200 = vmatprep.subr.mxu0 0.0
  %2201 = vmatpush1.msra.mxu0 0.0
  %2202 = vmatprep.subr.mxu0 0.0
  %2203 = vmatpush1.msra.mxu0 0.0
  %2204 = vmatprep.subr.mxu0 0.0
  %2205 = vmatpush1.msra.mxu0 0.0
  %2206 = vmatprep.subr.mxu0 0.0
  %2207 = vmatpush1.msra.mxu0 0.0
  %2208 = vmatprep.subr.mxu0 0.0
  %2209 = vmatpush1.msra.mxu0 0.0
  %2210 = vmatprep.subr.mxu0 0.0
  %2211 = vmatpush1.msra.mxu0 0.0
  %2212 = vmatprep.subr.mxu0 0.0
  %2213 = vmatpush1.msra.mxu0 0.0
  %2214 = vmatprep.subr.mxu0 0.0
  %2215 = vmatpush1.msra.mxu0 0.0
  %2216 = vmatprep.subr.mxu0 0.0
  %2217 = vmatpush1.msra.mxu0 0.0
  %2218 = vmatprep.subr.mxu0 0.0
  %2219 = vmatpush1.msra.mxu0 0.0
  %2220 = vmatprep.subr.mxu0 0.0
  %2221 = vmatpush1.msra.mxu0 0.0
  %2222 = vmatprep.subr.mxu0 0.0
  %2223 = vmatpush1.msra.mxu0 0.0
  %2224 = vmatprep.subr.mxu0 0.0
  %2225 = vmatpush1.msra.mxu0 0.0
  %2226 = vmatprep.subr.mxu0 0.0
  %2227 = vmatpush1.msra.mxu0 0.0
  %2228 = vmatprep.subr.mxu0 0.0
  %2229 = vmatpush1.msra.mxu0 0.0
  %2230 = vmatprep.subr.mxu0 0.0
  %2231 = vmatpush1.msra.mxu0 0.0
  %2232 = vmatprep.subr.mxu0 0.0
  %2233 = vmatpush1.msra.mxu0 0.0
  %2234 = vmatprep.subr.mxu0 0.0
  %2235 = vmatpush1.msra.mxu0 0.0
  %2236 = vmatprep.subr.mxu0 0.0
  %2237 = vmatpush1.msra.mxu0 0.0
  %2238 = vmatprep.subr.mxu0 0.0
  %2239 = vmatpush1.msra.mxu0 0.0
  %2240 = vmatprep.subr.mxu0 0.0
  %2241 = vmatpush1.msra.mxu0 0.0
  %2242 = vmatprep.subr.mxu0 0.0
  %2243 = vmatpush1.msra.mxu0 0.0
  %2244 = vmatprep.subr.mxu0 0.0
  %2245 = vmatpush1.msra.mxu0 0.0
  %2246 = vmatprep.subr.mxu0 0.0
  %2247 = vmatpush1.msra.mxu0 0.0
  %2248 = vmatprep.subr.mxu0 0.0
  %2249 = vmatpush1.msra.mxu0 0.0
  %2250 = vmatprep.subr.mxu0 0.0
  %2251 = vmatpush1.msra.mxu0 0.0
  %2252 = vmatprep.subr.mxu0 0.0
  %2253 = vmatpush1.msra.mxu0 0.0
  %2254 = vmatprep.subr.mxu0 0.0
  %2255 = vmatpush1.msra.mxu0 0.0
  %2256 = vmatprep.mubr.f32.mxu0 0.0
  %2257 = vmatmul.mubr.f32.gmra.mrb[0].mxu0 %v2190
  %v2258 = vpop.f32.mrb[0].mxu0
  %v2259 = vadd.f32 0.0, %v2258
  %v2260 = vpop.f32.mrb[0].mxu0
  %2261 = vdwg.mxu0
  %2263 = vrot.lane.b32.xlu0 %v2186, 32
  %v2264 = vpop.permute.xlu0 %2263
  %v2265 = vsel %vm203, %v2264, 0
  %2267 = vmatprep.subr.mxu0 0.0
  %2268 = vmatpush1.msra.mxu0 %v40
  %2269 = vmatprep.subr.mxu0 0.0
  %2270 = vmatpush1.msra.mxu0 %v41
  %2271 = vmatprep.subr.mxu0 0.0
  %2272 = vmatpush1.msra.mxu0 %v42
  %2273 = vmatprep.subr.mxu0 0.0
  %2274 = vmatpush1.msra.mxu0 %v43
  %2275 = vmatprep.subr.mxu0 0.0
  %2276 = vmatpush1.msra.mxu0 0.0
  %2277 = vmatprep.subr.mxu0 0.0
  %2278 = vmatpush1.msra.mxu0 0.0
  %2279 = vmatprep.subr.mxu0 0.0
  %2280 = vmatpush1.msra.mxu0 0.0
  %2281 = vmatprep.subr.mxu0 0.0
  %2282 = vmatpush1.msra.mxu0 0.0
  %2283 = vmatprep.subr.mxu0 0.0
  %2284 = vmatpush1.msra.mxu0 0.0
  %2285 = vmatprep.subr.mxu0 0.0
  %2286 = vmatpush1.msra.mxu0 0.0
  %2287 = vmatprep.subr.mxu0 0.0
  %2288 = vmatpush1.msra.mxu0 0.0
  %2289 = vmatprep.subr.mxu0 0.0
  %2290 = vmatpush1.msra.mxu0 0.0
  %2291 = vmatprep.subr.mxu0 0.0
  %2292 = vmatpush1.msra.mxu0 0.0
  %2293 = vmatprep.subr.mxu0 0.0
  %2294 = vmatpush1.msra.mxu0 0.0
  %2295 = vmatprep.subr.mxu0 0.0
  %2296 = vmatpush1.msra.mxu0 0.0
  %2297 = vmatprep.subr.mxu0 0.0
  %2298 = vmatpush1.msra.mxu0 0.0
  %2299 = vmatprep.subr.mxu0 0.0
  %2300 = vmatpush1.msra.mxu0 0.0
  %2301 = vmatprep.subr.mxu0 0.0
  %2302 = vmatpush1.msra.mxu0 0.0
  %2303 = vmatprep.subr.mxu0 0.0
  %2304 = vmatpush1.msra.mxu0 0.0
  %2305 = vmatprep.subr.mxu0 0.0
  %2306 = vmatpush1.msra.mxu0 0.0
  %2307 = vmatprep.subr.mxu0 0.0
  %2308 = vmatpush1.msra.mxu0 0.0
  %2309 = vmatprep.subr.mxu0 0.0
  %2310 = vmatpush1.msra.mxu0 0.0
  %2311 = vmatprep.subr.mxu0 0.0
  %2312 = vmatpush1.msra.mxu0 0.0
  %2313 = vmatprep.subr.mxu0 0.0
  %2314 = vmatpush1.msra.mxu0 0.0
  %2315 = vmatprep.subr.mxu0 0.0
  %2316 = vmatpush1.msra.mxu0 0.0
  %2317 = vmatprep.subr.mxu0 0.0
  %2318 = vmatpush1.msra.mxu0 0.0
  %2319 = vmatprep.subr.mxu0 0.0
  %2320 = vmatpush1.msra.mxu0 0.0
  %2321 = vmatprep.subr.mxu0 0.0
  %2322 = vmatpush1.msra.mxu0 0.0
  %2323 = vmatprep.subr.mxu0 0.0
  %2324 = vmatpush1.msra.mxu0 0.0
  %2325 = vmatprep.subr.mxu0 0.0
  %2326 = vmatpush1.msra.mxu0 0.0
  %2327 = vmatprep.subr.mxu0 0.0
  %2328 = vmatpush1.msra.mxu0 0.0
  %2329 = vmatprep.subr.mxu0 0.0
  %2330 = vmatpush1.msra.mxu0 0.0
  %2331 = vmatprep.mubr.f32.mxu0 0.0
  %2332 = vmatmul.mubr.f32.gmra.mrb[0].mxu0 %v2265
  %v2333 = vpop.f32.mrb[0].mxu0
  %v2334 = vadd.f32 %v2259, %v2333
  %v2335 = vpop.f32.mrb[0].mxu0
  %2336 = vdwg.mxu0
  %v2337 = vadd.f32 %v2334, %v201
  %v2338 = vxor.u32 %v2337, 2147483648
  %v2339 = vmul.f32 %v2338, 1.442695
  %v2340 = vpow.pop %v2339
  %v2341 = vadd.f32 %v2340, 1.0
  %v2342 = vrcp.pop %v2341
  %v2343 = vmul.f32 1.0, %v2342
  %v2344 = vtanh.pop %v2337
  %v2345 = vmul.f32 %v2343, %v2085
  %2347 = vrot.lane.b32.xlu0 %v2344, 64
  %v2348 = vpop.permute.xlu0 %2347
  %v2350 = vmul.f32 %v2343, %v2348
  %2352 = vrot.lane.b32.xlu0 %v2350, 32
  %v2353 = vpop.permute.xlu0 %2352
  %v2355 = vadd.f32 %v2345, %v2353
  %v2356 = vtanh.pop %v2355
  %2358 = vrot.lane.b32.xlu0 %v2356, 64
  %v2359 = vpop.permute.xlu0 %2358
  %v2361 = vmul.f32 %v2343, %v2359
  %v2362 = vld [vmem:[%s7] sm:$0xff]
  %v2363 = vld [vmem:[%s7 + $0x8] sm:$0xff]
  %v2364 = vld [vmem:[%s7 + $0x10] sm:$0xff]
  %v2365 = vld [vmem:[%s7 + $0x18] sm:$0xff]
  %v2366 = vld [vmem:[#allocation2] sm:$0x1]
  %v2368 = vlaneseq
  %v2369 = vshrl.u32 %v2368, 7
  %v2370 = vsub.s32 0, %v2369
  %v2371 = vrot.slane %v2366, %v2370
  %2374 = vrot.lane.b32.xlu0 %v2361, 32
  %v2375 = vpop.permute.xlu0 %2374
  %v2376 = vsel %vm203, %v2375, 0
  %2378 = vmatprep.subr.mxu0 0.0
  %2379 = vmatpush1.msra.mxu0 %v2362
  %2380 = vmatprep.subr.mxu0 0.0
  %2381 = vmatpush1.msra.mxu0 %v2363
  %2382 = vmatprep.subr.mxu0 0.0
  %2383 = vmatpush1.msra.mxu0 %v2364
  %2384 = vmatprep.subr.mxu0 0.0
  %2385 = vmatpush1.msra.mxu0 %v2365
  %2386 = vmatprep.subr.mxu0 0.0
  %2387 = vmatpush1.msra.mxu0 0.0
  %2388 = vmatprep.subr.mxu0 0.0
  %2389 = vmatpush1.msra.mxu0 0.0
  %2390 = vmatprep.subr.mxu0 0.0
  %2391 = vmatpush1.msra.mxu0 0.0
  %2392 = vmatprep.subr.mxu0 0.0
  %2393 = vmatpush1.msra.mxu0 0.0
  %2394 = vmatprep.subr.mxu0 0.0
  %2395 = vmatpush1.msra.mxu0 0.0
  %2396 = vmatprep.subr.mxu0 0.0
  %2397 = vmatpush1.msra.mxu0 0.0
  %2398 = vmatprep.subr.mxu0 0.0
  %2399 = vmatpush1.msra.mxu0 0.0
  %2400 = vmatprep.subr.mxu0 0.0
  %2401 = vmatpush1.msra.mxu0 0.0
  %2402 = vmatprep.subr.mxu0 0.0
  %2403 = vmatpush1.msra.mxu0 0.0
  %2404 = vmatprep.subr.mxu0 0.0
  %2405 = vmatpush1.msra.mxu0 0.0
  %2406 = vmatprep.subr.mxu0 0.0
  %2407 = vmatpush1.msra.mxu0 0.0
  %2408 = vmatprep.subr.mxu0 0.0
  %2409 = vmatpush1.msra.mxu0 0.0
  %2410 = vmatprep.subr.mxu0 0.0
  %2411 = vmatpush1.msra.mxu0 0.0
  %2412 = vmatprep.subr.mxu0 0.0
  %2413 = vmatpush1.msra.mxu0 0.0
  %2414 = vmatprep.subr.mxu0 0.0
  %2415 = vmatpush1.msra.mxu0 0.0
  %2416 = vmatprep.subr.mxu0 0.0
  %2417 = vmatpush1.msra.mxu0 0.0
  %2418 = vmatprep.subr.mxu0 0.0
  %2419 = vmatpush1.msra.mxu0 0.0
  %2420 = vmatprep.subr.mxu0 0.0
  %2421 = vmatpush1.msra.mxu0 0.0
  %2422 = vmatprep.subr.mxu0 0.0
  %2423 = vmatpush1.msra.mxu0 0.0
  %2424 = vmatprep.subr.mxu0 0.0
  %2425 = vmatpush1.msra.mxu0 0.0
  %2426 = vmatprep.subr.mxu0 0.0
  %2427 = vmatpush1.msra.mxu0 0.0
  %2428 = vmatprep.subr.mxu0 0.0
  %2429 = vmatpush1.msra.mxu0 0.0
  %2430 = vmatprep.subr.mxu0 0.0
  %2431 = vmatpush1.msra.mxu0 0.0
  %2432 = vmatprep.subr.mxu0 0.0
  %2433 = vmatpush1.msra.mxu0 0.0
  %2434 = vmatprep.subr.mxu0 0.0
  %2435 = vmatpush1.msra.mxu0 0.0
  %2436 = vmatprep.subr.mxu0 0.0
  %2437 = vmatpush1.msra.mxu0 0.0
  %2438 = vmatprep.subr.mxu0 0.0
  %2439 = vmatpush1.msra.mxu0 0.0
  %2440 = vmatprep.subr.mxu0 0.0
  %2441 = vmatpush1.msra.mxu0 0.0
  %2442 = vmatprep.mubr.f32.mxu0 0.0
  %2443 = vmatmul.mubr.f32.gmra.mrb[0].mxu0 %v2376
  %v2444 = vpop.f32.mrb[0].mxu0
  %v2445 = vadd.f32 %v2371, %v2444
  %v2446 = vpop.f32.mrb[0].mxu0
  %2447 = vdwg.mxu0
  %vm2448 = vcmask 7168
  %2449 = vst.msk [vmem:[%s9] sm:$0xff] %vm2448, %v2445
  // Predicated region
  $region38: #{tpu_custom_call.1} parent=0 // pred_check
    _
  $region39: #{tpu_custom_call.1} parent=0 // pred_check_branch
    %2451 = sbr.rel (0) target = $region41
  $region40: #{tpu_custom_call.1} parent=0 // pred_region
    _
  $region41: #{tpu_custom_call.1} parent=0 // pred_fallthru
    _
  // Predicated region
  $region42: #{tpu_custom_call.1} parent=0 // pred_check
    _
  $region43: #{tpu_custom_call.1} parent=0 // pred_check_branch
    %2453 = sbr.rel (0) target = $region45
  $region44: #{tpu_custom_call.1} parent=0 // pred_region
    _
  $region45: #{tpu_custom_call.1} parent=0 // pred_fallthru
    _

</llo_original>
